<compile_context>
chip_gen: v7x
topology: tpu7x:2x2x1
jax: 0.10.0
libtpu: 0.0.40
codegen_flags: <defaults>
</compile_context>

<pallas_src>
import functools
import math

import numpy as np
import jax
import jax.numpy as jnp
from jax.experimental import pallas as pl
from jax.experimental.pallas import tpu as pltpu


def _round_up(x, m):
    return (x + m - 1) // m * m


# ----------------------------------------------------------------------------
# Pallas kernel 1: generic matmul with fused per-column scale/bias (+ReLU) epilogue
#   (single-K-step fast path; multi-K accumulator path kept for generality)
# ----------------------------------------------------------------------------
def _mm_kernel(x_ref, w_ref, s_ref, b_ref, o_ref, *, act):
    y = jnp.dot(x_ref[...].astype(jnp.bfloat16), w_ref[...],
                preferred_element_type=jnp.float32)
    y = y * s_ref[...] + b_ref[...]
    if act == "relu":
        y = jnp.maximum(y, 0.0)
    o_ref[...] = y.astype(o_ref.dtype)


def _mm_kernel_acc(x_ref, w_ref, s_ref, b_ref, o_ref, acc_ref, *, act):
    @pl.when(pl.program_id(2) == 0)
    def _():
        acc_ref[...] = jnp.zeros_like(acc_ref)

    acc_ref[...] += jnp.dot(x_ref[...].astype(jnp.bfloat16), w_ref[...],
                            preferred_element_type=jnp.float32)

    @pl.when(pl.program_id(2) == pl.num_programs(2) - 1)
    def _():
        y = acc_ref[...] * s_ref[...] + b_ref[...]
        if act == "relu":
            y = jnp.maximum(y, 0.0)
        o_ref[...] = y.astype(o_ref.dtype)


def pallas_matmul(x, w, scale=None, bias=None, act=None, out_dtype=jnp.float32,
                  tm_max=1024, tn_max=512, tk_max=512):
    """y = act((x @ w) * scale + bias); scale/bias broadcast over rows (per out column).
    x is cast to bf16 in-kernel; w is cast to bf16 here (weights are small)."""
    M, K = x.shape
    K2, N = w.shape
    assert K == K2
    if scale is None:
        scale = jnp.ones((N,), jnp.float32)
    if bias is None:
        bias = jnp.zeros((N,), jnp.float32)

    # tile selection: prefer full-K / full-N (no padding) single-step tiles.
    if M <= tm_max:
        Mp = tm = M
    else:
        tm = tm_max
        Mp = _round_up(M, tm)
    if N <= tn_max:
        Np = tn = N
    else:
        Np = _round_up(N, 128)
        tn = tn_max if Np % tn_max == 0 else 128
    if K <= tk_max:
        Kp = tk = K
    else:
        Kp = _round_up(K, tk_max)
        tk = tk_max

    xp = x if (Mp, Kp) == (M, K) else jnp.pad(x, ((0, Mp - M), (0, Kp - K)))
    wp = (w if (Kp, Np) == (K, N) else jnp.pad(w, ((0, Kp - K), (0, Np - N))))
    wp = wp.astype(jnp.bfloat16)
    sp = (scale if Np == N else jnp.pad(scale, (0, Np - N))).reshape(1, Np).astype(jnp.float32)
    bp = (bias if Np == N else jnp.pad(bias, (0, Np - N))).reshape(1, Np).astype(jnp.float32)

    if Kp == tk:   # single K step: no accumulator scratch, 2-D grid
        out = pl.pallas_call(
            functools.partial(_mm_kernel, act=act),
            out_shape=jax.ShapeDtypeStruct((Mp, Np), out_dtype),
            grid_spec=pltpu.PrefetchScalarGridSpec(
                num_scalar_prefetch=0,
                grid=(Mp // tm, Np // tn),
                in_specs=[pl.BlockSpec((tm, Kp), lambda i, j: (i, 0)),
                          pl.BlockSpec((Kp, tn), lambda i, j: (0, j)),
                          pl.BlockSpec((1, tn), lambda i, j: (0, j)),
                          pl.BlockSpec((1, tn), lambda i, j: (0, j))],
                out_specs=pl.BlockSpec((tm, tn), lambda i, j: (i, j)),
            ),
            compiler_params=pltpu.CompilerParams(
                dimension_semantics=("parallel", "parallel")),
        )(xp, wp, sp, bp)
    else:
        out = pl.pallas_call(
            functools.partial(_mm_kernel_acc, act=act),
            out_shape=jax.ShapeDtypeStruct((Mp, Np), out_dtype),
            grid_spec=pltpu.PrefetchScalarGridSpec(
                num_scalar_prefetch=0,
                grid=(Mp // tm, Np // tn, Kp // tk),
                in_specs=[pl.BlockSpec((tm, tk), lambda i, j, k: (i, k)),
                          pl.BlockSpec((tk, tn), lambda i, j, k: (k, j)),
                          pl.BlockSpec((1, tn), lambda i, j, k: (0, j)),
                          pl.BlockSpec((1, tn), lambda i, j, k: (0, j))],
                out_specs=pl.BlockSpec((tm, tn), lambda i, j, k: (i, j)),
                scratch_shapes=[pltpu.VMEM((tm, tn), jnp.float32)],
            ),
            compiler_params=pltpu.CompilerParams(
                dimension_semantics=("parallel", "parallel", "arbitrary")),
        )(xp, wp, sp, bp)
    if (Mp, Np) != (M, N):
        out = out[:M, :N]
    return out


# ----------------------------------------------------------------------------
# Pallas kernel 2: fused "head" conv - 4 x (256ch sources) -> 256ch, BN+ReLU,
#                  channels-first in / channels-first out (no concat, no transposes)
# ----------------------------------------------------------------------------
def _head_kernel(x0_ref, x1_ref, x2_ref, x3_ref, w_ref, s_ref, b_ref, o_ref):
    acc = None
    for i, xr in enumerate((x0_ref, x1_ref, x2_ref, x3_ref)):
        x = xr[0].astype(jnp.bfloat16)                      # (256, tm) channels-first
        p = jnp.dot(w_ref[i], x, preferred_element_type=jnp.float32)   # (256, tm)
        acc = p if acc is None else acc + p
    y = jnp.maximum(acc * s_ref[...] + b_ref[...], 0.0)
    o_ref[0] = y.astype(o_ref.dtype)


def _fold_bn(layer):
    cout = layer["w"].shape[0]
    if "bn" in layer:
        gamma, beta, mean, var = layer["bn"]
        s = gamma / jnp.sqrt(var + 1e-5)
        b = beta - mean * s
    else:
        s = jnp.ones((cout,), jnp.float32)
        b = jnp.zeros((cout,), jnp.float32)
    if "b" in layer:
        b = b + layer["b"] * s
    return s, b


def head_conv(layer, x0, x11, x22, x33, tm=1024):
    """conv1x1(cat([x0,x11,x22,x33],ch)) + BN + ReLU without materializing the concat.
    Inputs NCHW; output (nb, 256, H*W) bf16 channels-first."""
    nb, _, H, W = x0.shape
    HW = H * W
    s, b = _fold_bn(layer)
    w = layer["w"]                                           # (256, 1024)
    Ws = jnp.stack([w[:, i * 256:(i + 1) * 256] for i in range(4)]).astype(jnp.bfloat16)
    sp = s.reshape(256, 1).astype(jnp.float32)
    bp = b.reshape(256, 1).astype(jnp.float32)
    srcs = [x0.reshape(nb, 256, HW), x11.reshape(nb, 256, HW),
            x22.reshape(nb, 256, HW), x33.reshape(nb, 256, HW)]
    tm = min(tm, HW)
    while HW % tm:
        tm //= 2
    return pl.pallas_call(
        _head_kernel,
        out_shape=jax.ShapeDtypeStruct((nb, 256, HW), jnp.bfloat16),
        grid_spec=pltpu.PrefetchScalarGridSpec(
            num_scalar_prefetch=0,
            grid=(nb, HW // tm),
            in_specs=[pl.BlockSpec((1, 256, tm), lambda bq, m: (bq, 0, m)) for _ in range(4)]
                     + [pl.BlockSpec((4, 256, 256), lambda bq, m: (0, 0, 0)),
                        pl.BlockSpec((256, 1), lambda bq, m: (0, 0)),
                        pl.BlockSpec((256, 1), lambda bq, m: (0, 0))],
            out_specs=pl.BlockSpec((1, 256, tm), lambda bq, m: (bq, 0, m)),
        ),
        compiler_params=pltpu.CompilerParams(
            dimension_semantics=("parallel", "parallel")),
    )(*srcs, Ws, sp, bp)


# ----------------------------------------------------------------------------
# Pallas kernel 3: fused OCR head + cls conv (per 128-row tile of pixels)
#   f_pixel(2x conv+BN+ReLU) -> softmax(Q K^T / sqrt(C)) V -> f_up -> conv_bn over
#   [ctx, feats] concat -> cls conv (256 -> 6).  Channels-first throughout.
# ----------------------------------------------------------------------------
def _ocr_cls_kernel(x_ref, k_ref, v_ref, w_ref, s_ref, b_ref, wcls_ref, bcls_ref,
                    o_ref, *, scale):
    x = x_ref[0].astype(jnp.bfloat16)                       # (256, tm)

    def cbr(w_idx, h_bf16, si):
        y = jnp.dot(w_ref[w_idx], h_bf16, preferred_element_type=jnp.float32)
        return jnp.maximum(y * s_ref[si] + b_ref[si], 0.0)

    # f_pixel: two conv+BN+ReLU
    q = cbr(0, x, 0)
    q = cbr(1, q.astype(jnp.bfloat16), 1)                   # (256, tm)

    # pixel -> 6-object attention (computed transposed: (6, tm))
    k = k_ref[0]                                            # (6, 256)  bf16
    v = v_ref[0]                                            # (256, 6)  bf16
    sim = jnp.dot(k, q.astype(jnp.bfloat16),
                  preferred_element_type=jnp.float32) * scale           # (6, tm)
    sim = sim - jnp.max(sim, axis=0, keepdims=True)
    e = jnp.exp(sim)
    p = e * pl.reciprocal(jnp.sum(e, axis=0, keepdims=True), approx=True)
    ctx = jnp.dot(v, p.astype(jnp.bfloat16), preferred_element_type=jnp.float32)  # (256, tm)

    # f_up
    ctx = cbr(2, ctx.astype(jnp.bfloat16), 2)

    # conv_bn over concat([ctx, feats]) == W_ctx @ ctx + W_feat @ feats
    h = (jnp.dot(w_ref[3], ctx.astype(jnp.bfloat16), preferred_element_type=jnp.float32)
         + jnp.dot(w_ref[4], x, preferred_element_type=jnp.float32))
    h = jnp.maximum(h * s_ref[3] + b_ref[3], 0.0)
    # Dropout2d(0.05): eval-mode identity.

    # cls head (256 -> 6, bias, no BN/ReLU)
    o = jnp.dot(wcls_ref[...], h.astype(jnp.bfloat16),
                preferred_element_type=jnp.float32) + bcls_ref[...]
    o_ref[0] = o.astype(o_ref.dtype)                        # (6, tm)


def ocr_cls_head(ocr, cls_w, cls_b, feats_cf, k_cl, v_cf, tm=1024):
    """feats_cf (nb,256,HW) bf16 channels-first; k_cl (nb,6,256); v_cf (nb,256,6).
    Returns (nb, 6, HW) f32 (== NCHW 6-channel mask logits)."""
    nb, C, HW = feats_cf.shape
    wcb = ocr["conv_bn"]["w"]                               # (256, 512)
    Ws = jnp.stack([ocr["f_pixel"][0]["w"], ocr["f_pixel"][1]["w"],
                    ocr["f_up"]["w"], wcb[:, :256], wcb[:, 256:]]).astype(jnp.bfloat16)
    sc, bi = zip(*[_fold_bn(l) for l in (ocr["f_pixel"][0], ocr["f_pixel"][1],
                                         ocr["f_up"], ocr["conv_bn"])])
    S = jnp.stack(sc).reshape(4, 256, 1).astype(jnp.float32)
    Bb = jnp.stack(bi).reshape(4, 256, 1).astype(jnp.float32)
    wcls = cls_w.astype(jnp.bfloat16)                       # (6, 256)
    bcls = cls_b.reshape(6, 1).astype(jnp.float32)
    tm = min(tm, HW)
    while HW % tm:
        tm //= 2
    return pl.pallas_call(
        functools.partial(_ocr_cls_kernel, scale=float(C) ** (-0.5)),
        out_shape=jax.ShapeDtypeStruct((nb, 6, HW), jnp.float32),
        grid_spec=pltpu.PrefetchScalarGridSpec(
            num_scalar_prefetch=0,
            grid=(nb, HW // tm),
            in_specs=[
                pl.BlockSpec((1, 256, tm), lambda b, m: (b, 0, m)),   # feats
                pl.BlockSpec((1, 6, 256), lambda b, m: (b, 0, 0)),    # key
                pl.BlockSpec((1, 256, 6), lambda b, m: (b, 0, 0)),    # value
                pl.BlockSpec((5, 256, 256), lambda b, m: (0, 0, 0)),  # conv weights
                pl.BlockSpec((4, 256, 1), lambda b, m: (0, 0, 0)),    # BN scales
                pl.BlockSpec((4, 256, 1), lambda b, m: (0, 0, 0)),    # BN biases
                pl.BlockSpec((6, 256), lambda b, m: (0, 0)),          # cls weight
                pl.BlockSpec((6, 1), lambda b, m: (0, 0)),            # cls bias
            ],
            out_specs=pl.BlockSpec((1, 6, tm), lambda b, m: (b, 0, m)),
        ),
        compiler_params=pltpu.CompilerParams(
            dimension_semantics=("parallel", "parallel")),
    )(feats_cf, k_cl, v_cf, Ws, S, Bb, wcls, bcls)


# ----------------------------------------------------------------------------
# Bilinear resize (align_corners=False) as two separable Pallas matmuls, NCHW in/out.
# Only small input-side axis swaps are needed; no big output transposes.
# ----------------------------------------------------------------------------
def _bilinear_matrix(in_size, out_size):
    i = np.arange(out_size, dtype=np.float64)
    src = (i + 0.5) * (in_size / out_size) - 0.5
    src = np.maximum(src, 0.0)
    x0 = np.minimum(np.floor(src).astype(np.int64), in_size - 1)
    x1 = np.where(x0 < in_size - 1, x0 + 1, x0)
    lam = src - x0
    R = np.zeros((out_size, in_size), dtype=np.float32)
    R[np.arange(out_size), x0] += (1.0 - lam)
    R[np.arange(out_size), x1] += lam
    return R


def bilinear_resize_nchw(x, out_h, out_w, out_dtype=jnp.float32):
    B, C, Hin, Win = x.shape
    Rh = jnp.asarray(_bilinear_matrix(Hin, out_h))           # (out_h, Hin)
    Rw = jnp.asarray(_bilinear_matrix(Win, out_w))           # (out_w, Win)
    # height pass
    xT = jnp.swapaxes(x, -1, -2).reshape(B * C * Win, Hin)
    y = pallas_matmul(xT, jnp.transpose(Rh), out_dtype=out_dtype)
    y = y.reshape(B, C, Win, out_h)
    # width pass (output lands directly in NCHW)
    yT = jnp.swapaxes(y, -1, -2).reshape(B * C * out_h, Win)
    z = pallas_matmul(yT, jnp.transpose(Rw), out_dtype=out_dtype)
    return z.reshape(B, C, out_h, out_w)


# ----------------------------------------------------------------------------
# Small glue (decoder ops on <=1024x256 tensors; heavy lifting stays in Pallas)
# ----------------------------------------------------------------------------
def layer_norm(x, g, b, eps=1e-5):
    m = jnp.mean(x, axis=-1, keepdims=True)
    v = jnp.mean((x - m) ** 2, axis=-1, keepdims=True)
    return (x - m) / jnp.sqrt(v + eps) * g + b


def pos_embed_sine(bs, h, w, num_pos_feats=128, temperature=10000.0):
    y = jnp.broadcast_to(jnp.arange(1, h + 1, dtype=jnp.float32)[None, :, None], (bs, h, w))
    x = jnp.broadcast_to(jnp.arange(1, w + 1, dtype=jnp.float32)[None, None, :], (bs, h, w))
    eps = 1e-6
    scale = 2.0 * math.pi
    y = y / (y[:, -1:, :] + eps) * scale
    x = x / (x[:, :, -1:] + eps) * scale
    dim_t = jnp.arange(num_pos_feats, dtype=jnp.float32)
    dim_t = temperature ** (2.0 * jnp.floor(dim_t / 2.0) / num_pos_feats)
    px = x[..., None] / dim_t
    py = y[..., None] / dim_t
    px = jnp.stack((jnp.sin(px[..., 0::2]), jnp.cos(px[..., 1::2])), axis=4).reshape(bs, h, w, num_pos_feats)
    py = jnp.stack((jnp.sin(py[..., 0::2]), jnp.cos(py[..., 1::2])), axis=4).reshape(bs, h, w, num_pos_feats)
    return jnp.transpose(jnp.concatenate((py, px), axis=3), (0, 3, 1, 2))   # (bs, 256, h, w)


def _apply_cbr(x_cl, layer, relu=True):
    """conv1x1+BN(+ReLU) on a tiny channels-last tensor (bs, n, C) -- plain JAX."""
    s, b = _fold_bn(layer)
    y = jnp.einsum("bjc,oc->bjo", x_cl, layer["w"]) * s + b
    return jnp.maximum(y, 0.0) if relu else y


def multihead_attention(q_in, k_in, v_in, p, attn_mask=None, num_heads=8):
    """torch nn.MultiheadAttention (batch_first=False) semantics."""
    L, N, E = q_in.shape
    S = k_in.shape[0]
    hd = E // num_heads
    Wq, Wk, Wv = p["in_w"][:E], p["in_w"][E:2 * E], p["in_w"][2 * E:]
    bq, bk, bv = p["in_b"][:E], p["in_b"][E:2 * E], p["in_b"][2 * E:]
    # 6-row query projection: plain JAX (Pallas padding would cost more than the op).
    q = (q_in.reshape(L * N, E) @ Wq.T + bq).reshape(L, N, num_heads, hd)
    if S * N >= 64:   # memory K/V projections go through the MXU kernel
        k = pallas_matmul(k_in.reshape(S * N, E), Wk.T, bias=bk).reshape(S, N, num_heads, hd)
        v = pallas_matmul(v_in.reshape(S * N, E), Wv.T, bias=bv).reshape(S, N, num_heads, hd)
    else:
        k = (k_in.reshape(S * N, E) @ Wk.T + bk).reshape(S, N, num_heads, hd)
        v = (v_in.reshape(S * N, E) @ Wv.T + bv).reshape(S, N, num_heads, hd)
    q = jnp.transpose(q, (1, 2, 0, 3)) * (hd ** -0.5)        # (N, H, L, hd)
    k = jnp.transpose(k, (1, 2, 0, 3))
    v = jnp.transpose(v, (1, 2, 0, 3))
    scores = jnp.einsum("nhld,nhsd->nhls", q, k)
    if attn_mask is not None:
        scores = jnp.where(attn_mask.reshape(N, num_heads, L, S), -jnp.inf, scores)
    scores = scores - jnp.max(scores, axis=-1, keepdims=True)
    e = jnp.exp(scores)
    attn = e / jnp.sum(e, axis=-1, keepdims=True)
    o = jnp.einsum("nhls,nhsd->nhld", attn, v)
    o = jnp.transpose(o, (2, 0, 1, 3)).reshape(L * N, E)
    return (o @ p["out_w"].T + p["out_b"]).reshape(L, N, E)


def cross_attention_layer(p, tgt, memory, memory_mask, pos, query_pos):
    tgt2 = multihead_attention(tgt + query_pos, memory + pos, memory, p, attn_mask=memory_mask)
    return layer_norm(tgt + tgt2, p["norm_g"], p["norm_b"])


def self_attention_layer(p, tgt, query_pos):
    qk = tgt + query_pos
    tgt2 = multihead_attention(qk, qk, tgt, p, attn_mask=None)
    return layer_norm(tgt + tgt2, p["norm_g"], p["norm_b"])


def ffn_layer(p, tgt):
    L, N, E = tgt.shape
    h = jnp.maximum(tgt.reshape(L * N, E) @ p["w1"].T + p["b1"], 0.0)
    h = (h @ p["w2"].T + p["b2"]).reshape(L, N, E)
    return layer_norm(tgt + h, p["norm_g"], p["norm_b"])


# ----------------------------------------------------------------------------
# Prediction heads and full forward
# ----------------------------------------------------------------------------
def forward_prediction_heads(params, output, mask_features_cf, mf_size,
                             attn_target_size, num_heads=8):
    H0, W0 = mf_size
    dec = layer_norm(output, params["decoder_norm_g"], params["decoder_norm_b"])  # (6, bs, 256)
    dec = jnp.transpose(dec, (1, 0, 2))                                           # (bs, 6, 256)
    nb = dec.shape[0]
    # torch does a raw .reshape of (bs,6,256) -> (bs,256,6,1); channels-last equivalent:
    proxy_cl = jnp.transpose(dec.reshape(nb, 256, 6), (0, 2, 1))                  # (bs, 6, 256)

    ocr = params["ocr"]
    # tiny 6-row f_object / f_down projections in plain JAX
    k_cl = _apply_cbr(_apply_cbr(proxy_cl, ocr["f_object"][0]), ocr["f_object"][1])  # (bs,6,256)
    v_cl = _apply_cbr(proxy_cl, ocr["f_down"])                                        # (bs,6,256)
    v_cf = jnp.transpose(v_cl, (0, 2, 1))                                             # (bs,256,6)

    m = ocr_cls_head(ocr, params["cls_w"], params["cls_b"], mask_features_cf,
                     k_cl.astype(jnp.bfloat16), v_cf.astype(jnp.bfloat16))            # (bs,6,HW)
    m = m.reshape(nb, 6, H0, W0)                                                      # NCHW already

    th, tw = attn_target_size
    a = bilinear_resize_nchw(m, th, tw)
    a = jax.nn.sigmoid(a).reshape(nb, 1, 6, th * tw)
    a = jnp.broadcast_to(a, (nb, num_heads, 6, th * tw)).reshape(nb * num_heads, 6, th * tw)
    attn_mask = a < 0.5
    out_mask = bilinear_resize_nchw(m, 512, 512)
    return out_mask, attn_mask


def hrnet_forward(params, xs):
    x0, x1, x2, x3 = xs[3], xs[2], xs[1], xs[0]
    nb = x0.shape[0]
    H0, W0 = x0.shape[-2:]

    # upsample the three coarse maps to (128,128); bf16 outputs feed the head kernel
    x11 = bilinear_resize_nchw(x1, H0, W0, out_dtype=jnp.bfloat16)
    x22 = bilinear_resize_nchw(x2, H0, W0, out_dtype=jnp.bfloat16)
    x33 = bilinear_resize_nchw(x3, H0, W0, out_dtype=jnp.bfloat16)
    # fused 1024->256 conv + BN + ReLU, no concat; (nb, 256, H0*W0) bf16 channels-first
    mask_features = head_conv(params["head"], x0, x11, x22, x33)

    query_embed = jnp.broadcast_to(params["query_embed"][:, None, :], (6, nb, 256))
    output = jnp.broadcast_to(params["query_feat"][:, None, :], (6, nb, 256))

    pos, src, size_list = [], [], []
    for i in range(3):
        H, W = xs[i].shape[-2:]
        size_list.append((H, W))
        p = pos_embed_sine(nb, H, W).reshape(nb, 256, H * W)
        s = xs[i].reshape(nb, 256, H * W) + params["level_embed"][i][None, :, None]
        pos.append(jnp.transpose(p, (2, 0, 1)))               # (HW, bs, 256)
        src.append(jnp.transpose(s, (2, 0, 1)))

    predictions_mask = []
    outputs_mask, attn_mask = forward_prediction_heads(
        params, output, mask_features, (H0, W0), size_list[0])
    predictions_mask.append(outputs_mask)

    for i in range(3):
        li = i % 3
        full_rows = jnp.sum(attn_mask, axis=-1) == attn_mask.shape[-1]
        attn_mask = jnp.where(full_rows[..., None], False, attn_mask)
        output = cross_attention_layer(params["cross"][i], output, src[li],
                                       attn_mask, pos[li], query_embed)
        output = self_attention_layer(params["self"][i], output, query_embed)
        output = ffn_layer(params["ffn"][i], output)
        outputs_mask, attn_mask = forward_prediction_heads(
            params, output, mask_features, (H0, W0), size_list[(i + 1) % 3])
        predictions_mask.append(outputs_mask)
    return predictions_mask


# ----------------------------------------------------------------------------
# Deterministic parameter construction
# ----------------------------------------------------------------------------
def init_params(key):
    num_classes, hidden, ffn_dim = 6, 256, 2048
    keys = iter(jax.random.split(key, 64))

    def nrm(shape, std=0.02):
        return jax.random.normal(next(keys), shape, jnp.float32) * std

    def bn_identity(c):
        return (jnp.ones((c,), jnp.float32), jnp.zeros((c,), jnp.float32),
                jnp.zeros((c,), jnp.float32), jnp.ones((c,), jnp.float32))

    def conv_layer(cin, cout, bias=False, bn=True):
        layer = {"w": nrm((cout, cin))}
        if bias:
            layer["b"] = jnp.zeros((cout,), jnp.float32)
        if bn:
            layer["bn"] = bn_identity(cout)
        return layer

    def attn_layer():
        return {"in_w": nrm((3 * hidden, hidden)), "in_b": jnp.zeros((3 * hidden,), jnp.float32),
                "out_w": nrm((hidden, hidden)), "out_b": jnp.zeros((hidden,), jnp.float32),
                "norm_g": jnp.ones((hidden,), jnp.float32), "norm_b": jnp.zeros((hidden,), jnp.float32)}

    def ffn_params():
        return {"w1": nrm((ffn_dim, hidden)), "b1": jnp.zeros((ffn_dim,), jnp.float32),
                "w2": nrm((hidden, ffn_dim)), "b2": jnp.zeros((hidden,), jnp.float32),
                "norm_g": jnp.ones((hidden,), jnp.float32), "norm_b": jnp.zeros((hidden,), jnp.float32)}

    params = {
        "head": conv_layer(1024, 256, bias=True, bn=True),
        "ocr": {
            "f_pixel": [conv_layer(256, 256), conv_layer(256, 256)],
            "f_object": [conv_layer(256, 256), conv_layer(256, 256)],
            "f_down": conv_layer(256, 256),
            "f_up": conv_layer(256, 256),
            "conv_bn": conv_layer(512, 256),
        },
        "cls_w": nrm((num_classes, 256)),
        "cls_b": jnp.zeros((num_classes,), jnp.float32),
        "level_embed": nrm((3, hidden), std=1.0),
        "query_feat": nrm((num_classes, hidden), std=1.0),
        "query_embed": nrm((num_classes, hidden), std=1.0),
        "decoder_norm_g": jnp.ones((hidden,), jnp.float32),
        "decoder_norm_b": jnp.zeros((hidden,), jnp.float32),
        "cross": [attn_layer() for _ in range(3)],
        "self": [attn_layer() for _ in range(3)],
        "ffn": [ffn_params() for _ in range(3)],
    }
    return params


if __name__ == "__main__":
    key = jax.random.PRNGKey(0)
    kp, k0, k1, k2, k3 = jax.random.split(key, 5)
    params = init_params(kp)

    bs = 1
    # x is a list of 4 NCHW feature maps with 256 channels each; the forward's hard-coded
    # cat at (128,128) forces x[3] to be 128x128 spatially.
    xs = [
        jax.random.normal(k0, (bs, 256, 8, 8), jnp.float32),
        jax.random.normal(k1, (bs, 256, 16, 16), jnp.float32),
        jax.random.normal(k2, (bs, 256, 32, 32), jnp.float32),
        jax.random.normal(k3, (bs, 256, 128, 128), jnp.float32),
    ]

    preds = hrnet_forward(params, xs)
    for p in preds:
        jax.block_until_ready(p)
    assert len(preds) == 4
    assert all(p.shape == (bs, 6, 512, 512) for p in preds)
    assert all(bool(jnp.all(jnp.isfinite(p))) for p in preds)
    print("KERNEL_OK")
</pallas_src>

<mosaic_0001>
module attributes {stable_mosaic.version = 11 : i64} {
  func.func @_mm_kernel(%arg0: i32, %arg1: i32, %arg2: memref<1024x32xf32, #tpu.memory_space<vmem>>, %arg3: memref<32x128xbf16, #tpu.memory_space<vmem>>, %arg4: memref<1x128xf32, #tpu.memory_space<vmem>>, %arg5: memref<1x128xf32, #tpu.memory_space<vmem>>, %arg6: memref<1024x128xbf16, #tpu.memory_space<vmem>>) attributes {dimension_semantics = [#tpu.dimension_semantics<parallel>, #tpu.dimension_semantics<parallel>], iteration_bounds = array<i64: 8, 1>, scalar_prefetch = 0 : i64, scratch_operands = 0 : i64, tpu.core_type = #tpu.core_type<tc>, window_params = [{transform_indices = @transform_0, window_bounds = array<i64: 1024, 32>}, {transform_indices = @transform_1, window_bounds = array<i64: 32, 128>}, {transform_indices = @transform_2, window_bounds = array<i64: 1, 128>}, {transform_indices = @transform_3, window_bounds = array<i64: 1, 128>}, {transform_indices = @transform_4, window_bounds = array<i64: 1024, 128>}]} {
    %c0 = arith.constant 0 : index
    %c0_0 = arith.constant 0 : index
    %0 = vector.load %arg2[%c0, %c0_0] : memref<1024x32xf32, #tpu.memory_space<vmem>>, vector<1024x32xf32>
    %1 = arith.truncf %0 : vector<1024x32xf32> to vector<1024x32xbf16>
    %c0_1 = arith.constant 0 : index
    %c0_2 = arith.constant 0 : index
    %2 = vector.load %arg3[%c0_1, %c0_2] : memref<32x128xbf16, #tpu.memory_space<vmem>>, vector<32x128xbf16>
    %cst = arith.constant dense<0.000000e+00> : vector<1024x128xf32>
    %3 = tpu.matmul %1, %2, %cst {dimension_numbers = #tpu.dot_dimension_numbers<[1], [0], [0], [1], [0, 0, 1, 1], [], []>} : vector<1024x32xbf16>, vector<32x128xbf16>, vector<1024x128xf32> -> vector<1024x128xf32>
    %c0_3 = arith.constant 0 : index
    %c0_4 = arith.constant 0 : index
    %4 = vector.load %arg4[%c0_3, %c0_4] : memref<1x128xf32, #tpu.memory_space<vmem>>, vector<1x128xf32>
    %5 = vector.broadcast %4 : vector<1x128xf32> to vector<1024x128xf32>
    %6 = arith.mulf %3, %5 : vector<1024x128xf32>
    %c0_5 = arith.constant 0 : index
    %c0_6 = arith.constant 0 : index
    %7 = vector.load %arg5[%c0_5, %c0_6] : memref<1x128xf32, #tpu.memory_space<vmem>>, vector<1x128xf32>
    %8 = vector.broadcast %7 : vector<1x128xf32> to vector<1024x128xf32>
    %9 = arith.addf %6, %8 : vector<1024x128xf32>
    %10 = arith.truncf %9 : vector<1024x128xf32> to vector<1024x128xbf16>
    %c0_7 = arith.constant 0 : index
    %c0_8 = arith.constant 0 : index
    %11 = vector.load %arg6[%c0_7, %c0_8] : memref<1024x128xbf16, #tpu.memory_space<vmem>>, vector<1024x128xbf16>
    tpu.vector_store %arg6[%c0_7, %c0_8], %10 {strides = array<i32>} : memref<1024x128xbf16, #tpu.memory_space<vmem>>, vector<1024x128xbf16>,
    return
  }
  func.func @transform_0(%arg0: i32, %arg1: i32) -> (i32, i32) {
    %c0_i32 = arith.constant 0 : i32
    %c0_i32_0 = arith.constant 0 : i32
    return %arg0, %c0_i32 : i32, i32
  }
  func.func @transform_1(%arg0: i32, %arg1: i32) -> (i32, i32) {
    %c0_i32 = arith.constant 0 : i32
    %c0_i32_0 = arith.constant 0 : i32
    return %c0_i32, %arg1 : i32, i32
  }
  func.func @transform_2(%arg0: i32, %arg1: i32) -> (i32, i32) {
    %c0_i32 = arith.constant 0 : i32
    %c0_i32_0 = arith.constant 0 : i32
    return %c0_i32, %arg1 : i32, i32
  }
  func.func @transform_3(%arg0: i32, %arg1: i32) -> (i32, i32) {
    %c0_i32 = arith.constant 0 : i32
    %c0_i32_0 = arith.constant 0 : i32
    return %c0_i32, %arg1 : i32, i32
  }
  func.func @transform_4(%arg0: i32, %arg1: i32) -> (i32, i32) {
    %c0_i32 = arith.constant 0 : i32
    return %arg0, %arg1 : i32, i32
  }
}

</mosaic_0001>

<llo_original>
// kernel: tpu_custom_call.1
$region0: #{tpu_custom_call.1}
  #allocation0 [shape = 'u32[]', space=smem, size = 0x4, offset = 0x4, fixed_abs, tag = 'smem constant byte address 0x4 - core index']
  #allocation1 [shape = 'u32[144,128]{1,0:T(1,128)}', space=vmem, size = 0x12000, scoped, tag = 'internal scratch']
  %s0 = inlined_call_operand.vmem [shape: f32[8192,32], index: 0, kind: input, shape index: {}]
  %s1 = inlined_call_operand.vmem [shape: bf16[32,128], index: 1, kind: input, shape index: {}]
  %s2 = inlined_call_operand.vmem [shape: f32[1,128], index: 2, kind: input, shape index: {}]
  %s3 = inlined_call_operand.vmem [shape: f32[1,128], index: 3, kind: input, shape index: {}]
  %s4 = inlined_call_operand.hbm [shape: bf16[8192,128], index: 4, kind: output, shape index: {}]
  %s5 = sld [smem:[#allocation0]]
  $region49: #{tpu_custom_call.1} parent=0
    _
  %s7 = ssub.s32 1, %s5
  %s8 = scalar_select 0, %s7, %s5
  $region1: #{tpu_custom_call.1} parent=0
    #allocation2 [shape = 'u8[524288]{0}', space=vmem, size = 0x80000, scoped, tag = 'output window, operand 0']
    #allocation3 [shape = 's32[2]{0}', space=sflag, size = 0x8, scoped, tag = 'scoped memory for tpu_custom_call.1']
    %9 = vsyncpa [#allocation3], 0
    %s10 = scalar_lea.sflag [#allocation3], 1
    %11 = vsyncpa %s10, 0
    loop: start=0, step=1, limit=10
    $region2: #{tpu_custom_call.1} parent=1 // loop_pre_header
      _
    $region3: #{tpu_custom_call.1} parent=1 // loop_header
      %s13 = sphi 0, %s17
      %p14 = scmp.ge.s32.totalorder %s13, 10
      %s20 = sphi 0, %s32
      %s21 = sphi 0, %s28
      %s22 = sphi 0, %s20
      %s23 = sphi 0, %s21
      %s24 = sphi 0, %s22
      %s25 = sphi 0, %s23
      %s35 = sphi 0, %s37
      %s38 = sphi 0, %s35
      %s39 = sphi 0, %s38
      %s55 = sphi 0, %s39
      %s61 = sphi 0, %s63
      %s64 = sphi 0, %s61
      %s65 = sphi 0, %s64
      %s81 = sphi 0, %s65
      %s87 = sphi 0, %s89
      %s90 = sphi 0, %s87
      %s91 = sphi 0, %s90
      %s107 = sphi 0, %s91
      %s113 = sphi 0, %s115
      %s116 = sphi 0, %s113
      %s117 = sphi 0, %s116
      %s133 = sphi 0, %s117
      %s141 = sphi 0, %s143
      %s144 = sphi 0, %s141
      %s145 = sphi 0, %s144
      %s161 = sphi 0, %s145
    $region4: #{tpu_custom_call.1} parent=1 // loop_header_branch
      %16 = sbr.rel (%p14) target = $region8
    $region5: #{tpu_custom_call.1} parent=1 // loop_body
      %s18 = ssub.s32 %s13, 1
      %s19 = ssub.s32 %s13, 2
      %s26 = sadd.s32 1, %s21
      %p27 = scmp.ge.s32.totalorder %s26, 1
      %s28 = scalar_select %p27, 0, %s26
      %s29 = sadd.s32 1, %s20
      %s30 = scalar_select %p27, %s29, %s20
      %p31 = scmp.ge.s32.totalorder %s30, 8
      %s32 = scalar_select %p31, 0, %s30
      %s33 = ssub.s32 %s20, %s32
      %p34 = scmp.eq.s32.totalorder %s33, 0
      %s36 = sadd.s32 %s35, 1
      %s37 = scalar_select %p34, %s35, %s36
      %p40 = pneg %p34
      %p41 = scmp.eq.s32.totalorder %s13, 7
      %p42 = por %p40, %p41
      %p43 = scmp.ne.s32.totalorder %s35, %s38
      %p44 = scmp.eq.s32.totalorder %s13, 0
      %p45 = por %p43, %p44
      %p46 = scmp.ne.s32.totalorder %s35, %s38
      %p47 = scmp.eq.s32.totalorder %s18, 7
      %p48 = por %p46, %p47
      %p49 = scmp.ne.s32.totalorder %s38, %s39
      %p50 = scmp.eq.s32.totalorder %s18, 0
      %p51 = por %p49, %p50
      %p52 = scmp.ne.s32.totalorder %s38, %s39
      %p53 = scmp.eq.s32.totalorder %s19, 7
      %p54 = por %p52, %p53
      %p56 = scmp.ne.s32.totalorder %s39, %s55
      %p57 = scmp.eq.s32.totalorder %s19, 0
      %p58 = por %p56, %p57
      %s59 = ssub.s32 %s21, %s28
      %p60 = scmp.eq.s32.totalorder %s59, 0
      %s62 = sadd.s32 %s61, 1
      %s63 = scalar_select %p60, %s61, %s62
      %p66 = pneg %p60
      %p67 = scmp.eq.s32.totalorder %s13, 7
      %p68 = por %p66, %p67
      %p69 = scmp.ne.s32.totalorder %s61, %s64
      %p70 = scmp.eq.s32.totalorder %s13, 0
      %p71 = por %p69, %p70
      %p72 = scmp.ne.s32.totalorder %s61, %s64
      %p73 = scmp.eq.s32.totalorder %s18, 7
      %p74 = por %p72, %p73
      %p75 = scmp.ne.s32.totalorder %s64, %s65
      %p76 = scmp.eq.s32.totalorder %s18, 0
      %p77 = por %p75, %p76
      %p78 = scmp.ne.s32.totalorder %s64, %s65
      %p79 = scmp.eq.s32.totalorder %s19, 7
      %p80 = por %p78, %p79
      %p82 = scmp.ne.s32.totalorder %s65, %s81
      %p83 = scmp.eq.s32.totalorder %s19, 0
      %p84 = por %p82, %p83
      %s85 = ssub.s32 %s21, %s28
      %p86 = scmp.eq.s32.totalorder %s85, 0
      %s88 = sadd.s32 %s87, 1
      %s89 = scalar_select %p86, %s87, %s88
      %p92 = pneg %p86
      %p93 = scmp.eq.s32.totalorder %s13, 7
      %p94 = por %p92, %p93
      %p95 = scmp.ne.s32.totalorder %s87, %s90
      %p96 = scmp.eq.s32.totalorder %s13, 0
      %p97 = por %p95, %p96
      %p98 = scmp.ne.s32.totalorder %s87, %s90
      %p99 = scmp.eq.s32.totalorder %s18, 7
      %p100 = por %p98, %p99
      %p101 = scmp.ne.s32.totalorder %s90, %s91
      %p102 = scmp.eq.s32.totalorder %s18, 0
      %p103 = por %p101, %p102
      %p104 = scmp.ne.s32.totalorder %s90, %s91
      %p105 = scmp.eq.s32.totalorder %s19, 7
      %p106 = por %p104, %p105
      %p108 = scmp.ne.s32.totalorder %s91, %s107
      %p109 = scmp.eq.s32.totalorder %s19, 0
      %p110 = por %p108, %p109
      %s111 = ssub.s32 %s21, %s28
      %p112 = scmp.eq.s32.totalorder %s111, 0
      %s114 = sadd.s32 %s113, 1
      %s115 = scalar_select %p112, %s113, %s114
      %p118 = pneg %p112
      %p119 = scmp.eq.s32.totalorder %s13, 7
      %p120 = por %p118, %p119
      %p121 = scmp.ne.s32.totalorder %s113, %s116
      %p122 = scmp.eq.s32.totalorder %s13, 0
      %p123 = por %p121, %p122
      %p124 = scmp.ne.s32.totalorder %s113, %s116
      %p125 = scmp.eq.s32.totalorder %s18, 7
      %p126 = por %p124, %p125
      %p127 = scmp.ne.s32.totalorder %s116, %s117
      %p128 = scmp.eq.s32.totalorder %s18, 0
      %p129 = por %p127, %p128
      %p130 = scmp.ne.s32.totalorder %s116, %s117
      %p131 = scmp.eq.s32.totalorder %s19, 7
      %p132 = por %p130, %p131
      %p134 = scmp.ne.s32.totalorder %s117, %s133
      %p135 = scmp.eq.s32.totalorder %s19, 0
      %p136 = por %p134, %p135
      %s137 = ssub.s32 %s20, %s32
      %s138 = ssub.s32 %s21, %s28
      %s139 = sor.u32 %s137, %s138
      %p140 = scmp.eq.s32.totalorder %s139, 0
      %s142 = sadd.s32 %s141, 1
      %s143 = scalar_select %p140, %s141, %s142
      %p146 = pneg %p140
      %p147 = scmp.eq.s32.totalorder %s13, 7
      %p148 = por %p146, %p147
      %p149 = scmp.ne.s32.totalorder %s141, %s144
      %p150 = scmp.eq.s32.totalorder %s13, 0
      %p151 = por %p149, %p150
      %p152 = scmp.ne.s32.totalorder %s141, %s144
      %p153 = scmp.eq.s32.totalorder %s18, 7
      %p154 = por %p152, %p153
      %p155 = scmp.ne.s32.totalorder %s144, %s145
      %p156 = scmp.eq.s32.totalorder %s18, 0
      %p157 = por %p155, %p156
      %p158 = scmp.ne.s32.totalorder %s144, %s145
      %p159 = scmp.eq.s32.totalorder %s19, 7
      %p160 = por %p158, %p159
      %p162 = scmp.ne.s32.totalorder %s145, %s161
      %p163 = scmp.eq.s32.totalorder %s19, 0
      %p164 = por %p162, %p163
      %p165 = scmp.le.s32.totalorder 1, %s13
      %p166 = scmp.lt.s32.totalorder %s13, 9
      %p167 = pnand %p165, %p166
      %p168 = pneg %p167
      // Predicated region
      $region9: #{tpu_custom_call.1} parent=5 // pred_check
        _
      $region10: #{tpu_custom_call.1} parent=5 // pred_check_branch
        %170 = sbr.rel (%p167) target = $region12
      $region11: #{tpu_custom_call.1} parent=5 // pred_region
        %s171 = ssub.s32 %s13, 1
        // Predicated region
        $region13: #{tpu_custom_call.1} parent=11 // pred_check
          %p172 = pneg %p77
        $region14: #{tpu_custom_call.1} parent=11 // pred_check_branch
          %174 = sbr.rel (%p172) target = $region16
        $region15: #{tpu_custom_call.1} parent=11 // pred_region
          %p175 = scmp.lt.s32.totalorder %s23, 0
          %s176 = scalar_select %p175, %s23, 0
          %s177 = smul.addr %s176, 4
          %s178 = scalar_lea.vmem %s1, %s177
        $region16: #{tpu_custom_call.1} parent=11 // pred_fallthru
          _
        // Predicated region
        $region17: #{tpu_custom_call.1} parent=11 // pred_check
          %p179 = pneg %p103
        $region18: #{tpu_custom_call.1} parent=11 // pred_check_branch
          %181 = sbr.rel (%p179) target = $region20
        $region19: #{tpu_custom_call.1} parent=11 // pred_region
          %p182 = scmp.lt.s32.totalorder %s23, 0
          %s183 = scalar_select %p182, %s23, 0
          %s184 = scalar_lea.vmem %s2, %s183
        $region20: #{tpu_custom_call.1} parent=11 // pred_fallthru
          _
        // Predicated region
        $region21: #{tpu_custom_call.1} parent=11 // pred_check
          %p185 = pneg %p129
        $region22: #{tpu_custom_call.1} parent=11 // pred_check_branch
          %187 = sbr.rel (%p185) target = $region24
        $region23: #{tpu_custom_call.1} parent=11 // pred_region
          %p188 = scmp.lt.s32.totalorder %s23, 0
          %s189 = scalar_select %p188, %s23, 0
          %s190 = scalar_lea.vmem %s3, %s189
        $region24: #{tpu_custom_call.1} parent=11 // pred_fallthru
          _
      $region12: #{tpu_custom_call.1} parent=5 // pred_fallthru
        _
      %p191 = scmp.lt.s32.totalorder %s13, 8
      // Predicated region
      $region25: #{tpu_custom_call.1} parent=5 // pred_check
        %p192 = pneg %p191
      $region26: #{tpu_custom_call.1} parent=5 // pred_check_branch
        %194 = sbr.rel (%p192) target = $region28
      $region27: #{tpu_custom_call.1} parent=5 // pred_region
        // Predicated region
        $region29: #{tpu_custom_call.1} parent=27 // pred_check
          %p195 = pneg %p45
        $region30: #{tpu_custom_call.1} parent=27 // pred_check_branch
          %197 = sbr.rel (%p195) target = $region32
        $region31: #{tpu_custom_call.1} parent=27 // pred_region
          %s198 = smul.u32 128, %s20
          %p199 = scmp.lt.s32.totalorder %s198, 1023
          %s200 = scalar_select %p199, %s198, 1023
          %s201 = smul.addr %s200, 8
          %s202 = scalar_lea.vmem %s0, %s201
          %s203 = smul.u32 128, %s20
        $region32: #{tpu_custom_call.1} parent=27 // pred_fallthru
          _
      $region28: #{tpu_custom_call.1} parent=5 // pred_fallthru
        _
      %p204 = scmp.le.s32.totalorder 1, %s13
      %p205 = scmp.lt.s32.totalorder %s13, 9
      %p206 = pnand %p204, %p205
      %p207 = pneg %p206
      // Predicated region
      $region33: #{tpu_custom_call.1} parent=5 // pred_check
        _
      $region34: #{tpu_custom_call.1} parent=5 // pred_check_branch
        %209 = sbr.rel (%p206) target = $region36
      $region35: #{tpu_custom_call.1} parent=5 // pred_region
        %s210 = ssub.s32 %s13, 1
        %s211 = smul.u32 128, %s22
        %p212 = scmp.lt.s32.totalorder %s211, 1023
        %s213 = scalar_select %p212, %s211, 1023
        %s214 = smul.addr %s213, 8
        %s215 = scalar_lea.vmem %s0, %s214
        %p216 = pneg %p51
        %p217 = pneg %p48
        %p218 = scmp.lt.s32.totalorder %s23, 0
        %s219 = scalar_select %p218, %s23, 0
        %s220 = smul.addr %s219, 4
        %s221 = scalar_lea.vmem %s1, %s220
        %p222 = pneg %p77
        %p223 = pneg %p74
        %p224 = scmp.lt.s32.totalorder %s23, 0
        %s225 = scalar_select %p224, %s23, 0
        %s226 = scalar_lea.vmem %s2, %s225
        %p227 = pneg %p103
        %p228 = pneg %p100
        %p229 = scmp.lt.s32.totalorder %s23, 0
        %s230 = scalar_select %p229, %s23, 0
        %s231 = scalar_lea.vmem %s3, %s230
        %p232 = pneg %p129
        %p233 = pneg %p126
        %p234 = pneg %p157
        %p235 = pneg %p154
        %s236 = sand.u32 %s144, 1
        %s237 = scalar_lea.sflag [#allocation3], %s236
        %s238 = sand.u32 %s144, 1
        %s239 = smul.addr %s238, 512
        %s240 = scalar_lea.vmem [#allocation2], %s239
        %s241 = smul.u32 128, %s22
        %p242 = scmp.lt.s32.totalorder %s241, 1023
        %s243 = scalar_select %p242, %s241, 1023
        %s244 = smul.addr %s243, 8
        %s245 = scalar_lea.vmem %s0, %s244
        %s246 = smul.u32 128, %s22
        %p247 = scmp.lt.s32.totalorder %s23, 0
        %s248 = scalar_select %p247, %s23, 0
        %s249 = smul.addr %s248, 4
        %s250 = scalar_lea.vmem %s1, %s249
        %p251 = scmp.lt.s32.totalorder %s23, 0
        %s252 = scalar_select %p251, %s23, 0
        %s253 = scalar_lea.vmem %s2, %s252
        %p254 = scmp.lt.s32.totalorder %s23, 0
        %s255 = scalar_select %p254, %s23, 0
        %s256 = scalar_lea.vmem %s3, %s255
        %s257 = smul.u32 128, %s22
        %v259 = vld [vmem:[%s245] sm:$0xff]
        %v260 = vld [vmem:[%s245 + $0x8] sm:$0xff]
        %v261 = vld [vmem:[%s245 + $0x10] sm:$0xff]
        %v262 = vld [vmem:[%s245 + $0x18] sm:$0xff]
        %v263 = vld [vmem:[%s245 + $0x20] sm:$0xff]
        %v264 = vld [vmem:[%s245 + $0x28] sm:$0xff]
        %v265 = vld [vmem:[%s245 + $0x30] sm:$0xff]
        %v266 = vld [vmem:[%s245 + $0x38] sm:$0xff]
        %v267 = vld [vmem:[%s245 + $0x40] sm:$0xff]
        %v268 = vld [vmem:[%s245 + $0x48] sm:$0xff]
        %v269 = vld [vmem:[%s245 + $0x50] sm:$0xff]
        %v270 = vld [vmem:[%s245 + $0x58] sm:$0xff]
        %v271 = vld [vmem:[%s245 + $0x60] sm:$0xff]
        %v272 = vld [vmem:[%s245 + $0x68] sm:$0xff]
        %v273 = vld [vmem:[%s245 + $0x70] sm:$0xff]
        %v274 = vld [vmem:[%s245 + $0x78] sm:$0xff]
        %v275 = vld [vmem:[%s245 + $0x80] sm:$0xff]
        %v276 = vld [vmem:[%s245 + $0x88] sm:$0xff]
        %v277 = vld [vmem:[%s245 + $0x90] sm:$0xff]
        %v278 = vld [vmem:[%s245 + $0x98] sm:$0xff]
        %v279 = vld [vmem:[%s245 + $0xa0] sm:$0xff]
        %v280 = vld [vmem:[%s245 + $0xa8] sm:$0xff]
        %v281 = vld [vmem:[%s245 + $0xb0] sm:$0xff]
        %v282 = vld [vmem:[%s245 + $0xb8] sm:$0xff]
        %v283 = vld [vmem:[%s245 + $0xc0] sm:$0xff]
        %v284 = vld [vmem:[%s245 + $0xc8] sm:$0xff]
        %v285 = vld [vmem:[%s245 + $0xd0] sm:$0xff]
        %v286 = vld [vmem:[%s245 + $0xd8] sm:$0xff]
        %v287 = vld [vmem:[%s245 + $0xe0] sm:$0xff]
        %v288 = vld [vmem:[%s245 + $0xe8] sm:$0xff]
        %v289 = vld [vmem:[%s245 + $0xf0] sm:$0xff]
        %v290 = vld [vmem:[%s245 + $0xf8] sm:$0xff]
        %v291 = vld [vmem:[%s245 + $0x100] sm:$0xff]
        %v292 = vld [vmem:[%s245 + $0x108] sm:$0xff]
        %v293 = vld [vmem:[%s245 + $0x110] sm:$0xff]
        %v294 = vld [vmem:[%s245 + $0x118] sm:$0xff]
        %v295 = vld [vmem:[%s245 + $0x120] sm:$0xff]
        %v296 = vld [vmem:[%s245 + $0x128] sm:$0xff]
        %v297 = vld [vmem:[%s245 + $0x130] sm:$0xff]
        %v298 = vld [vmem:[%s245 + $0x138] sm:$0xff]
        %v299 = vld [vmem:[%s245 + $0x140] sm:$0xff]
        %v300 = vld [vmem:[%s245 + $0x148] sm:$0xff]
        %v301 = vld [vmem:[%s245 + $0x150] sm:$0xff]
        %v302 = vld [vmem:[%s245 + $0x158] sm:$0xff]
        %v303 = vld [vmem:[%s245 + $0x160] sm:$0xff]
        %v304 = vld [vmem:[%s245 + $0x168] sm:$0xff]
        %v305 = vld [vmem:[%s245 + $0x170] sm:$0xff]
        %v306 = vld [vmem:[%s245 + $0x178] sm:$0xff]
        %v307 = vld [vmem:[%s245 + $0x180] sm:$0xff]
        %v308 = vld [vmem:[%s245 + $0x188] sm:$0xff]
        %v309 = vld [vmem:[%s245 + $0x190] sm:$0xff]
        %v310 = vld [vmem:[%s245 + $0x198] sm:$0xff]
        %v311 = vld [vmem:[%s245 + $0x1a0] sm:$0xff]
        %v312 = vld [vmem:[%s245 + $0x1a8] sm:$0xff]
        %v313 = vld [vmem:[%s245 + $0x1b0] sm:$0xff]
        %v314 = vld [vmem:[%s245 + $0x1b8] sm:$0xff]
        %v315 = vld [vmem:[%s245 + $0x1c0] sm:$0xff]
        %v316 = vld [vmem:[%s245 + $0x1c8] sm:$0xff]
        %v317 = vld [vmem:[%s245 + $0x1d0] sm:$0xff]
        %v318 = vld [vmem:[%s245 + $0x1d8] sm:$0xff]
        %v319 = vld [vmem:[%s245 + $0x1e0] sm:$0xff]
        %v320 = vld [vmem:[%s245 + $0x1e8] sm:$0xff]
        %v321 = vld [vmem:[%s245 + $0x1f0] sm:$0xff]
        %v322 = vld [vmem:[%s245 + $0x1f8] sm:$0xff]
        %v323 = vld [vmem:[%s245 + $0x200] sm:$0xff]
        %v324 = vld [vmem:[%s245 + $0x208] sm:$0xff]
        %v325 = vld [vmem:[%s245 + $0x210] sm:$0xff]
        %v326 = vld [vmem:[%s245 + $0x218] sm:$0xff]
        %v327 = vld [vmem:[%s245 + $0x220] sm:$0xff]
        %v328 = vld [vmem:[%s245 + $0x228] sm:$0xff]
        %v329 = vld [vmem:[%s245 + $0x230] sm:$0xff]
        %v330 = vld [vmem:[%s245 + $0x238] sm:$0xff]
        %v331 = vld [vmem:[%s245 + $0x240] sm:$0xff]
        %v332 = vld [vmem:[%s245 + $0x248] sm:$0xff]
        %v333 = vld [vmem:[%s245 + $0x250] sm:$0xff]
        %v334 = vld [vmem:[%s245 + $0x258] sm:$0xff]
        %v335 = vld [vmem:[%s245 + $0x260] sm:$0xff]
        %v336 = vld [vmem:[%s245 + $0x268] sm:$0xff]
        %v337 = vld [vmem:[%s245 + $0x270] sm:$0xff]
        %v338 = vld [vmem:[%s245 + $0x278] sm:$0xff]
        %v339 = vld [vmem:[%s245 + $0x280] sm:$0xff]
        %v340 = vld [vmem:[%s245 + $0x288] sm:$0xff]
        %v341 = vld [vmem:[%s245 + $0x290] sm:$0xff]
        %v342 = vld [vmem:[%s245 + $0x298] sm:$0xff]
        %v343 = vld [vmem:[%s245 + $0x2a0] sm:$0xff]
        %v344 = vld [vmem:[%s245 + $0x2a8] sm:$0xff]
        %v345 = vld [vmem:[%s245 + $0x2b0] sm:$0xff]
        %v346 = vld [vmem:[%s245 + $0x2b8] sm:$0xff]
        %v347 = vld [vmem:[%s245 + $0x2c0] sm:$0xff]
        %v348 = vld [vmem:[%s245 + $0x2c8] sm:$0xff]
        %v349 = vld [vmem:[%s245 + $0x2d0] sm:$0xff]
        %v350 = vld [vmem:[%s245 + $0x2d8] sm:$0xff]
        %v351 = vld [vmem:[%s245 + $0x2e0] sm:$0xff]
        %v352 = vld [vmem:[%s245 + $0x2e8] sm:$0xff]
        %v353 = vld [vmem:[%s245 + $0x2f0] sm:$0xff]
        %v354 = vld [vmem:[%s245 + $0x2f8] sm:$0xff]
        %v355 = vld [vmem:[%s245 + $0x300] sm:$0xff]
        %v356 = vld [vmem:[%s245 + $0x308] sm:$0xff]
        %v357 = vld [vmem:[%s245 + $0x310] sm:$0xff]
        %v358 = vld [vmem:[%s245 + $0x318] sm:$0xff]
        %v359 = vld [vmem:[%s245 + $0x320] sm:$0xff]
        %v360 = vld [vmem:[%s245 + $0x328] sm:$0xff]
        %v361 = vld [vmem:[%s245 + $0x330] sm:$0xff]
        %v362 = vld [vmem:[%s245 + $0x338] sm:$0xff]
        %v363 = vld [vmem:[%s245 + $0x340] sm:$0xff]
        %v364 = vld [vmem:[%s245 + $0x348] sm:$0xff]
        %v365 = vld [vmem:[%s245 + $0x350] sm:$0xff]
        %v366 = vld [vmem:[%s245 + $0x358] sm:$0xff]
        %v367 = vld [vmem:[%s245 + $0x360] sm:$0xff]
        %v368 = vld [vmem:[%s245 + $0x368] sm:$0xff]
        %v369 = vld [vmem:[%s245 + $0x370] sm:$0xff]
        %v370 = vld [vmem:[%s245 + $0x378] sm:$0xff]
        %v371 = vld [vmem:[%s245 + $0x380] sm:$0xff]
        %v372 = vld [vmem:[%s245 + $0x388] sm:$0xff]
        %v373 = vld [vmem:[%s245 + $0x390] sm:$0xff]
        %v374 = vld [vmem:[%s245 + $0x398] sm:$0xff]
        %v375 = vld [vmem:[%s245 + $0x3a0] sm:$0xff]
        %v376 = vld [vmem:[%s245 + $0x3a8] sm:$0xff]
        %v377 = vld [vmem:[%s245 + $0x3b0] sm:$0xff]
        %v378 = vld [vmem:[%s245 + $0x3b8] sm:$0xff]
        %v379 = vld [vmem:[%s245 + $0x3c0] sm:$0xff]
        %v380 = vld [vmem:[%s245 + $0x3c8] sm:$0xff]
        %v381 = vld [vmem:[%s245 + $0x3d0] sm:$0xff]
        %v382 = vld [vmem:[%s245 + $0x3d8] sm:$0xff]
        %v383 = vld [vmem:[%s245 + $0x3e0] sm:$0xff]
        %v384 = vld [vmem:[%s245 + $0x3e8] sm:$0xff]
        %v385 = vld [vmem:[%s245 + $0x3f0] sm:$0xff]
        %v386 = vld [vmem:[%s245 + $0x3f8] sm:$0xff]
        %v387 = vpack.c.bf16 %v260, %v259
        %v388 = vpack.c.bf16 %v262, %v261
        %v389 = vpack.c.bf16 %v264, %v263
        %v390 = vpack.c.bf16 %v266, %v265
        %v391 = vpack.c.bf16 %v268, %v267
        %v392 = vpack.c.bf16 %v270, %v269
        %v393 = vpack.c.bf16 %v272, %v271
        %v394 = vpack.c.bf16 %v274, %v273
        %v395 = vpack.c.bf16 %v276, %v275
        %v396 = vpack.c.bf16 %v278, %v277
        %v397 = vpack.c.bf16 %v280, %v279
        %v398 = vpack.c.bf16 %v282, %v281
        %v399 = vpack.c.bf16 %v284, %v283
        %v400 = vpack.c.bf16 %v286, %v285
        %v401 = vpack.c.bf16 %v288, %v287
        %v402 = vpack.c.bf16 %v290, %v289
        %v403 = vpack.c.bf16 %v292, %v291
        %v404 = vpack.c.bf16 %v294, %v293
        %v405 = vpack.c.bf16 %v296, %v295
        %v406 = vpack.c.bf16 %v298, %v297
        %v407 = vpack.c.bf16 %v300, %v299
        %v408 = vpack.c.bf16 %v302, %v301
        %v409 = vpack.c.bf16 %v304, %v303
        %v410 = vpack.c.bf16 %v306, %v305
        %v411 = vpack.c.bf16 %v308, %v307
        %v412 = vpack.c.bf16 %v310, %v309
        %v413 = vpack.c.bf16 %v312, %v311
        %v414 = vpack.c.bf16 %v314, %v313
        %v415 = vpack.c.bf16 %v316, %v315
        %v416 = vpack.c.bf16 %v318, %v317
        %v417 = vpack.c.bf16 %v320, %v319
        %v418 = vpack.c.bf16 %v322, %v321
        %v419 = vpack.c.bf16 %v324, %v323
        %v420 = vpack.c.bf16 %v326, %v325
        %v421 = vpack.c.bf16 %v328, %v327
        %v422 = vpack.c.bf16 %v330, %v329
        %v423 = vpack.c.bf16 %v332, %v331
        %v424 = vpack.c.bf16 %v334, %v333
        %v425 = vpack.c.bf16 %v336, %v335
        %v426 = vpack.c.bf16 %v338, %v337
        %v427 = vpack.c.bf16 %v340, %v339
        %v428 = vpack.c.bf16 %v342, %v341
        %v429 = vpack.c.bf16 %v344, %v343
        %v430 = vpack.c.bf16 %v346, %v345
        %v431 = vpack.c.bf16 %v348, %v347
        %v432 = vpack.c.bf16 %v350, %v349
        %v433 = vpack.c.bf16 %v352, %v351
        %v434 = vpack.c.bf16 %v354, %v353
        %v435 = vpack.c.bf16 %v356, %v355
        %v436 = vpack.c.bf16 %v358, %v357
        %v437 = vpack.c.bf16 %v360, %v359
        %v438 = vpack.c.bf16 %v362, %v361
        %v439 = vpack.c.bf16 %v364, %v363
        %v440 = vpack.c.bf16 %v366, %v365
        %v441 = vpack.c.bf16 %v368, %v367
        %v442 = vpack.c.bf16 %v370, %v369
        %v443 = vpack.c.bf16 %v372, %v371
        %v444 = vpack.c.bf16 %v374, %v373
        %v445 = vpack.c.bf16 %v376, %v375
        %v446 = vpack.c.bf16 %v378, %v377
        %v447 = vpack.c.bf16 %v380, %v379
        %v448 = vpack.c.bf16 %v382, %v381
        %v449 = vpack.c.bf16 %v384, %v383
        %v450 = vpack.c.bf16 %v386, %v385
        %v451 = vld [vmem:[%s250] sm:$0xf]
        %v452 = vld [vmem:[%s250 + $0x4] sm:$0xf]
        %v453 = vld [vmem:[%s250 + $0x8] sm:$0xf]
        %v454 = vld [vmem:[%s250 + $0xc] sm:$0xf]
        %v459 = vunpack.c.l.b16 %v451
        %v460 = vunpack.c.l.b16 %v452
        %v461 = vunpack.c.l.b16 %v453
        %v462 = vunpack.c.l.b16 %v454
        %v463 = vpack.c.b16 %v460, %v459
        %v464 = vpack.c.b16 %v462, %v461
        %vm467 = vcmask 261120
        %v469 = vsel %vm467, %v387, 0
        %v472 = vsel %vm467, %v388, 0
        %v475 = vsel %vm467, %v389, 0
        %v478 = vsel %vm467, %v390, 0
        %v481 = vsel %vm467, %v391, 0
        %v484 = vsel %vm467, %v392, 0
        %v487 = vsel %vm467, %v393, 0
        %v490 = vsel %vm467, %v394, 0
        %v493 = vsel %vm467, %v395, 0
        %v496 = vsel %vm467, %v396, 0
        %v499 = vsel %vm467, %v397, 0
        %v502 = vsel %vm467, %v398, 0
        %v505 = vsel %vm467, %v399, 0
        %v508 = vsel %vm467, %v400, 0
        %v511 = vsel %vm467, %v401, 0
        %v514 = vsel %vm467, %v402, 0
        %v517 = vsel %vm467, %v403, 0
        %v520 = vsel %vm467, %v404, 0
        %v523 = vsel %vm467, %v405, 0
        %v526 = vsel %vm467, %v406, 0
        %v529 = vsel %vm467, %v407, 0
        %v532 = vsel %vm467, %v408, 0
        %v535 = vsel %vm467, %v409, 0
        %v538 = vsel %vm467, %v410, 0
        %v541 = vsel %vm467, %v411, 0
        %v544 = vsel %vm467, %v412, 0
        %v547 = vsel %vm467, %v413, 0
        %v550 = vsel %vm467, %v414, 0
        %v553 = vsel %vm467, %v415, 0
        %v556 = vsel %vm467, %v416, 0
        %v559 = vsel %vm467, %v417, 0
        %v562 = vsel %vm467, %v418, 0
        %v565 = vsel %vm467, %v419, 0
        %v568 = vsel %vm467, %v420, 0
        %v571 = vsel %vm467, %v421, 0
        %v574 = vsel %vm467, %v422, 0
        %v577 = vsel %vm467, %v423, 0
        %v580 = vsel %vm467, %v424, 0
        %v583 = vsel %vm467, %v425, 0
        %v586 = vsel %vm467, %v426, 0
        %v589 = vsel %vm467, %v427, 0
        %v592 = vsel %vm467, %v428, 0
        %v595 = vsel %vm467, %v429, 0
        %v598 = vsel %vm467, %v430, 0
        %v601 = vsel %vm467, %v431, 0
        %v604 = vsel %vm467, %v432, 0
        %v607 = vsel %vm467, %v433, 0
        %v610 = vsel %vm467, %v434, 0
        %v613 = vsel %vm467, %v435, 0
        %v616 = vsel %vm467, %v436, 0
        %v619 = vsel %vm467, %v437, 0
        %v622 = vsel %vm467, %v438, 0
        %v625 = vsel %vm467, %v439, 0
        %v628 = vsel %vm467, %v440, 0
        %v631 = vsel %vm467, %v441, 0
        %v634 = vsel %vm467, %v442, 0
        %v637 = vsel %vm467, %v443, 0
        %v640 = vsel %vm467, %v444, 0
        %v643 = vsel %vm467, %v445, 0
        %v646 = vsel %vm467, %v446, 0
        %v649 = vsel %vm467, %v447, 0
        %v652 = vsel %vm467, %v448, 0
        %v655 = vsel %vm467, %v449, 0
        %v658 = vsel %vm467, %v450, 0
        %660 = vmatprep.subr.bf16.mxu0 0
        %661 = vmatpush1.bf16.msra.mxu0 %v463
        %662 = vmatprep.subr.bf16.mxu0 0
        %663 = vmatpush1.bf16.msra.mxu0 %v464
        %664 = vmatprep.subr.bf16.mxu0 0
        %665 = vmatpush1.bf16.msra.mxu0 0
        %666 = vmatprep.subr.bf16.mxu0 0
        %667 = vmatpush1.bf16.msra.mxu0 0
        %668 = vmatprep.subr.bf16.mxu0 0
        %669 = vmatpush1.bf16.msra.mxu0 0
        %670 = vmatprep.subr.bf16.mxu0 0
        %671 = vmatpush1.bf16.msra.mxu0 0
        %672 = vmatprep.subr.bf16.mxu0 0
        %673 = vmatpush1.bf16.msra.mxu0 0
        %674 = vmatprep.subr.bf16.mxu0 0
        %675 = vmatpush1.bf16.msra.mxu0 0
        %676 = vmatprep.subr.bf16.mxu0 0
        %677 = vmatpush1.bf16.msra.mxu0 0
        %678 = vmatprep.subr.bf16.mxu0 0
        %679 = vmatpush1.bf16.msra.mxu0 0
        %680 = vmatprep.subr.bf16.mxu0 0
        %681 = vmatpush1.bf16.msra.mxu0 0
        %682 = vmatprep.subr.bf16.mxu0 0
        %683 = vmatpush1.bf16.msra.mxu0 0
        %684 = vmatprep.subr.bf16.mxu0 0
        %685 = vmatpush1.bf16.msra.mxu0 0
        %686 = vmatprep.subr.bf16.mxu0 0
        %687 = vmatpush1.bf16.msra.mxu0 0
        %688 = vmatprep.subr.bf16.mxu0 0
        %689 = vmatpush1.bf16.msra.mxu0 0
        %690 = vmatprep.subr.bf16.mxu0 0
        %691 = vmatpush1.bf16.msra.mxu0 0
        %692 = vmatprep.mubr.bf16.mxu0 0
        %693 = vmatmul.mubr.bf16.gmra.mrb[0].mxu0 %v469
        %v694 = vpop.f32.mrb[0].mxu0
        %v695 = vadd.f32 0.0, %v694
        %v696 = vpop.f32.mrb[0].mxu0
        %v697 = vpop.f32.mrb[0].mxu0
        %v698 = vadd.f32 0.0, %v697
        %v699 = vpop.f32.mrb[0].mxu0
        %700 = vmatprep.mubr.bf16.mxu0 0
        %701 = vmatmul.mubr.bf16.gmra.mrb[0].mxu0 %v472
        %v702 = vpop.f32.mrb[0].mxu0
        %v703 = vadd.f32 0.0, %v702
        %v704 = vpop.f32.mrb[0].mxu0
        %v705 = vpop.f32.mrb[0].mxu0
        %v706 = vadd.f32 0.0, %v705
        %v707 = vpop.f32.mrb[0].mxu0
        %708 = vmatprep.mubr.bf16.mxu0 0
        %709 = vmatmul.mubr.bf16.gmra.mrb[0].mxu0 %v475
        %v710 = vpop.f32.mrb[0].mxu0
        %v711 = vadd.f32 0.0, %v710
        %v712 = vpop.f32.mrb[0].mxu0
        %v713 = vpop.f32.mrb[0].mxu0
        %v714 = vadd.f32 0.0, %v713
        %v715 = vpop.f32.mrb[0].mxu0
        %716 = vmatprep.mubr.bf16.mxu0 0
        %717 = vmatmul.mubr.bf16.gmra.mrb[0].mxu0 %v478
        %v718 = vpop.f32.mrb[0].mxu0
        %v719 = vadd.f32 0.0, %v718
        %v720 = vpop.f32.mrb[0].mxu0
        %v721 = vpop.f32.mrb[0].mxu0
        %v722 = vadd.f32 0.0, %v721
        %v723 = vpop.f32.mrb[0].mxu0
        %724 = vmatprep.mubr.bf16.mxu0 0
        %725 = vmatmul.mubr.bf16.gmra.mrb[0].mxu0 %v481
        %v726 = vpop.f32.mrb[0].mxu0
        %v727 = vadd.f32 0.0, %v726
        %v728 = vpop.f32.mrb[0].mxu0
        %v729 = vpop.f32.mrb[0].mxu0
        %v730 = vadd.f32 0.0, %v729
        %v731 = vpop.f32.mrb[0].mxu0
        %732 = vmatprep.mubr.bf16.mxu0 0
        %733 = vmatmul.mubr.bf16.gmra.mrb[0].mxu0 %v484
        %v734 = vpop.f32.mrb[0].mxu0
        %v735 = vadd.f32 0.0, %v734
        %v736 = vpop.f32.mrb[0].mxu0
        %v737 = vpop.f32.mrb[0].mxu0
        %v738 = vadd.f32 0.0, %v737
        %v739 = vpop.f32.mrb[0].mxu0
        %740 = vmatprep.mubr.bf16.mxu0 0
        %741 = vmatmul.mubr.bf16.gmra.mrb[0].mxu0 %v487
        %v742 = vpop.f32.mrb[0].mxu0
        %v743 = vadd.f32 0.0, %v742
        %v744 = vpop.f32.mrb[0].mxu0
        %v745 = vpop.f32.mrb[0].mxu0
        %v746 = vadd.f32 0.0, %v745
        %v747 = vpop.f32.mrb[0].mxu0
        %748 = vmatprep.mubr.bf16.mxu0 0
        %749 = vmatmul.mubr.bf16.gmra.mrb[0].mxu0 %v490
        %v750 = vpop.f32.mrb[0].mxu0
        %v751 = vadd.f32 0.0, %v750
        %v752 = vpop.f32.mrb[0].mxu0
        %v753 = vpop.f32.mrb[0].mxu0
        %v754 = vadd.f32 0.0, %v753
        %v755 = vpop.f32.mrb[0].mxu0
        %756 = vmatprep.mubr.bf16.mxu0 0
        %757 = vmatmul.mubr.bf16.gmra.mrb[0].mxu0 %v493
        %v758 = vpop.f32.mrb[0].mxu0
        %v759 = vadd.f32 0.0, %v758
        %v760 = vpop.f32.mrb[0].mxu0
        %v761 = vpop.f32.mrb[0].mxu0
        %v762 = vadd.f32 0.0, %v761
        %v763 = vpop.f32.mrb[0].mxu0
        %764 = vmatprep.mubr.bf16.mxu0 0
        %765 = vmatmul.mubr.bf16.gmra.mrb[0].mxu0 %v496
        %v766 = vpop.f32.mrb[0].mxu0
        %v767 = vadd.f32 0.0, %v766
        %v768 = vpop.f32.mrb[0].mxu0
        %v769 = vpop.f32.mrb[0].mxu0
        %v770 = vadd.f32 0.0, %v769
        %v771 = vpop.f32.mrb[0].mxu0
        %772 = vmatprep.mubr.bf16.mxu0 0
        %773 = vmatmul.mubr.bf16.gmra.mrb[0].mxu0 %v499
        %v774 = vpop.f32.mrb[0].mxu0
        %v775 = vadd.f32 0.0, %v774
        %v776 = vpop.f32.mrb[0].mxu0
        %v777 = vpop.f32.mrb[0].mxu0
        %v778 = vadd.f32 0.0, %v777
        %v779 = vpop.f32.mrb[0].mxu0
        %780 = vmatprep.mubr.bf16.mxu0 0
        %781 = vmatmul.mubr.bf16.gmra.mrb[0].mxu0 %v502
        %v782 = vpop.f32.mrb[0].mxu0
        %v783 = vadd.f32 0.0, %v782
        %v784 = vpop.f32.mrb[0].mxu0
        %v785 = vpop.f32.mrb[0].mxu0
        %v786 = vadd.f32 0.0, %v785
        %v787 = vpop.f32.mrb[0].mxu0
        %788 = vmatprep.mubr.bf16.mxu0 0
        %789 = vmatmul.mubr.bf16.gmra.mrb[0].mxu0 %v505
        %v790 = vpop.f32.mrb[0].mxu0
        %v791 = vadd.f32 0.0, %v790
        %v792 = vpop.f32.mrb[0].mxu0
        %v793 = vpop.f32.mrb[0].mxu0
        %v794 = vadd.f32 0.0, %v793
        %v795 = vpop.f32.mrb[0].mxu0
        %796 = vmatprep.mubr.bf16.mxu0 0
        %797 = vmatmul.mubr.bf16.gmra.mrb[0].mxu0 %v508
        %v798 = vpop.f32.mrb[0].mxu0
        %v799 = vadd.f32 0.0, %v798
        %v800 = vpop.f32.mrb[0].mxu0
        %v801 = vpop.f32.mrb[0].mxu0
        %v802 = vadd.f32 0.0, %v801
        %v803 = vpop.f32.mrb[0].mxu0
        %804 = vmatprep.mubr.bf16.mxu0 0
        %805 = vmatmul.mubr.bf16.gmra.mrb[0].mxu0 %v511
        %v806 = vpop.f32.mrb[0].mxu0
        %v807 = vadd.f32 0.0, %v806
        %v808 = vpop.f32.mrb[0].mxu0
        %v809 = vpop.f32.mrb[0].mxu0
        %v810 = vadd.f32 0.0, %v809
        %v811 = vpop.f32.mrb[0].mxu0
        %812 = vmatprep.mubr.bf16.mxu0 0
        %813 = vmatmul.mubr.bf16.gmra.mrb[0].mxu0 %v514
        %v814 = vpop.f32.mrb[0].mxu0
        %v815 = vadd.f32 0.0, %v814
        %v816 = vpop.f32.mrb[0].mxu0
        %v817 = vpop.f32.mrb[0].mxu0
        %v818 = vadd.f32 0.0, %v817
        %v819 = vpop.f32.mrb[0].mxu0
        %820 = vmatprep.mubr.bf16.mxu0 0
        %821 = vmatmul.mubr.bf16.gmra.mrb[0].mxu0 %v517
        %v822 = vpop.f32.mrb[0].mxu0
        %v823 = vadd.f32 0.0, %v822
        %v824 = vpop.f32.mrb[0].mxu0
        %v825 = vpop.f32.mrb[0].mxu0
        %v826 = vadd.f32 0.0, %v825
        %v827 = vpop.f32.mrb[0].mxu0
        %828 = vmatprep.mubr.bf16.mxu0 0
        %829 = vmatmul.mubr.bf16.gmra.mrb[0].mxu0 %v520
        %v830 = vpop.f32.mrb[0].mxu0
        %v831 = vadd.f32 0.0, %v830
        %v832 = vpop.f32.mrb[0].mxu0
        %v833 = vpop.f32.mrb[0].mxu0
        %v834 = vadd.f32 0.0, %v833
        %v835 = vpop.f32.mrb[0].mxu0
        %836 = vmatprep.mubr.bf16.mxu0 0
        %837 = vmatmul.mubr.bf16.gmra.mrb[0].mxu0 %v523
        %v838 = vpop.f32.mrb[0].mxu0
        %v839 = vadd.f32 0.0, %v838
        %v840 = vpop.f32.mrb[0].mxu0
        %v841 = vpop.f32.mrb[0].mxu0
        %v842 = vadd.f32 0.0, %v841
        %v843 = vpop.f32.mrb[0].mxu0
        %844 = vmatprep.mubr.bf16.mxu0 0
        %845 = vmatmul.mubr.bf16.gmra.mrb[0].mxu0 %v526
        %v846 = vpop.f32.mrb[0].mxu0
        %v847 = vadd.f32 0.0, %v846
        %v848 = vpop.f32.mrb[0].mxu0
        %v849 = vpop.f32.mrb[0].mxu0
        %v850 = vadd.f32 0.0, %v849
        %v851 = vpop.f32.mrb[0].mxu0
        %852 = vmatprep.mubr.bf16.mxu0 0
        %853 = vmatmul.mubr.bf16.gmra.mrb[0].mxu0 %v529
        %v854 = vpop.f32.mrb[0].mxu0
        %v855 = vadd.f32 0.0, %v854
        %v856 = vpop.f32.mrb[0].mxu0
        %v857 = vpop.f32.mrb[0].mxu0
        %v858 = vadd.f32 0.0, %v857
        %v859 = vpop.f32.mrb[0].mxu0
        %860 = vmatprep.mubr.bf16.mxu0 0
        %861 = vmatmul.mubr.bf16.gmra.mrb[0].mxu0 %v532
        %v862 = vpop.f32.mrb[0].mxu0
        %v863 = vadd.f32 0.0, %v862
        %v864 = vpop.f32.mrb[0].mxu0
        %v865 = vpop.f32.mrb[0].mxu0
        %v866 = vadd.f32 0.0, %v865
        %v867 = vpop.f32.mrb[0].mxu0
        %868 = vmatprep.mubr.bf16.mxu0 0
        %869 = vmatmul.mubr.bf16.gmra.mrb[0].mxu0 %v535
        %v870 = vpop.f32.mrb[0].mxu0
        %v871 = vadd.f32 0.0, %v870
        %v872 = vpop.f32.mrb[0].mxu0
        %v873 = vpop.f32.mrb[0].mxu0
        %v874 = vadd.f32 0.0, %v873
        %v875 = vpop.f32.mrb[0].mxu0
        %876 = vmatprep.mubr.bf16.mxu0 0
        %877 = vmatmul.mubr.bf16.gmra.mrb[0].mxu0 %v538
        %v878 = vpop.f32.mrb[0].mxu0
        %v879 = vadd.f32 0.0, %v878
        %v880 = vpop.f32.mrb[0].mxu0
        %v881 = vpop.f32.mrb[0].mxu0
        %v882 = vadd.f32 0.0, %v881
        %v883 = vpop.f32.mrb[0].mxu0
        %884 = vmatprep.mubr.bf16.mxu0 0
        %885 = vmatmul.mubr.bf16.gmra.mrb[0].mxu0 %v541
        %v886 = vpop.f32.mrb[0].mxu0
        %v887 = vadd.f32 0.0, %v886
        %v888 = vpop.f32.mrb[0].mxu0
        %v889 = vpop.f32.mrb[0].mxu0
        %v890 = vadd.f32 0.0, %v889
        %v891 = vpop.f32.mrb[0].mxu0
        %892 = vmatprep.mubr.bf16.mxu0 0
        %893 = vmatmul.mubr.bf16.gmra.mrb[0].mxu0 %v544
        %v894 = vpop.f32.mrb[0].mxu0
        %v895 = vadd.f32 0.0, %v894
        %v896 = vpop.f32.mrb[0].mxu0
        %v897 = vpop.f32.mrb[0].mxu0
        %v898 = vadd.f32 0.0, %v897
        %v899 = vpop.f32.mrb[0].mxu0
        %900 = vmatprep.mubr.bf16.mxu0 0
        %901 = vmatmul.mubr.bf16.gmra.mrb[0].mxu0 %v547
        %v902 = vpop.f32.mrb[0].mxu0
        %v903 = vadd.f32 0.0, %v902
        %v904 = vpop.f32.mrb[0].mxu0
        %v905 = vpop.f32.mrb[0].mxu0
        %v906 = vadd.f32 0.0, %v905
        %v907 = vpop.f32.mrb[0].mxu0
        %908 = vmatprep.mubr.bf16.mxu0 0
        %909 = vmatmul.mubr.bf16.gmra.mrb[0].mxu0 %v550
        %v910 = vpop.f32.mrb[0].mxu0
        %v911 = vadd.f32 0.0, %v910
        %v912 = vpop.f32.mrb[0].mxu0
        %v913 = vpop.f32.mrb[0].mxu0
        %v914 = vadd.f32 0.0, %v913
        %v915 = vpop.f32.mrb[0].mxu0
        %916 = vmatprep.mubr.bf16.mxu0 0
        %917 = vmatmul.mubr.bf16.gmra.mrb[0].mxu0 %v553
        %v918 = vpop.f32.mrb[0].mxu0
        %v919 = vadd.f32 0.0, %v918
        %v920 = vpop.f32.mrb[0].mxu0
        %v921 = vpop.f32.mrb[0].mxu0
        %v922 = vadd.f32 0.0, %v921
        %v923 = vpop.f32.mrb[0].mxu0
        %924 = vmatprep.mubr.bf16.mxu0 0
        %925 = vmatmul.mubr.bf16.gmra.mrb[0].mxu0 %v556
        %v926 = vpop.f32.mrb[0].mxu0
        %v927 = vadd.f32 0.0, %v926
        %v928 = vpop.f32.mrb[0].mxu0
        %v929 = vpop.f32.mrb[0].mxu0
        %v930 = vadd.f32 0.0, %v929
        %v931 = vpop.f32.mrb[0].mxu0
        %932 = vmatprep.mubr.bf16.mxu0 0
        %933 = vmatmul.mubr.bf16.gmra.mrb[0].mxu0 %v559
        %v934 = vpop.f32.mrb[0].mxu0
        %v935 = vadd.f32 0.0, %v934
        %v936 = vpop.f32.mrb[0].mxu0
        %v937 = vpop.f32.mrb[0].mxu0
        %v938 = vadd.f32 0.0, %v937
        %v939 = vpop.f32.mrb[0].mxu0
        %940 = vmatprep.mubr.bf16.mxu0 0
        %941 = vmatmul.mubr.bf16.gmra.mrb[0].mxu0 %v562
        %v942 = vpop.f32.mrb[0].mxu0
        %v943 = vadd.f32 0.0, %v942
        %v944 = vpop.f32.mrb[0].mxu0
        %v945 = vpop.f32.mrb[0].mxu0
        %v946 = vadd.f32 0.0, %v945
        %v947 = vpop.f32.mrb[0].mxu0
        %948 = vmatprep.mubr.bf16.mxu0 0
        %949 = vmatmul.mubr.bf16.gmra.mrb[0].mxu0 %v565
        %v950 = vpop.f32.mrb[0].mxu0
        %v951 = vadd.f32 0.0, %v950
        %v952 = vpop.f32.mrb[0].mxu0
        %v953 = vpop.f32.mrb[0].mxu0
        %v954 = vadd.f32 0.0, %v953
        %v955 = vpop.f32.mrb[0].mxu0
        %956 = vmatprep.mubr.bf16.mxu0 0
        %957 = vmatmul.mubr.bf16.gmra.mrb[0].mxu0 %v568
        %v958 = vpop.f32.mrb[0].mxu0
        %v959 = vadd.f32 0.0, %v958
        %v960 = vpop.f32.mrb[0].mxu0
        %v961 = vpop.f32.mrb[0].mxu0
        %v962 = vadd.f32 0.0, %v961
        %v963 = vpop.f32.mrb[0].mxu0
        %964 = vmatprep.mubr.bf16.mxu0 0
        %965 = vmatmul.mubr.bf16.gmra.mrb[0].mxu0 %v571
        %v966 = vpop.f32.mrb[0].mxu0
        %v967 = vadd.f32 0.0, %v966
        %v968 = vpop.f32.mrb[0].mxu0
        %v969 = vpop.f32.mrb[0].mxu0
        %v970 = vadd.f32 0.0, %v969
        %v971 = vpop.f32.mrb[0].mxu0
        %972 = vmatprep.mubr.bf16.mxu0 0
        %973 = vmatmul.mubr.bf16.gmra.mrb[0].mxu0 %v574
        %v974 = vpop.f32.mrb[0].mxu0
        %v975 = vadd.f32 0.0, %v974
        %v976 = vpop.f32.mrb[0].mxu0
        %v977 = vpop.f32.mrb[0].mxu0
        %v978 = vadd.f32 0.0, %v977
        %v979 = vpop.f32.mrb[0].mxu0
        %980 = vmatprep.mubr.bf16.mxu0 0
        %981 = vmatmul.mubr.bf16.gmra.mrb[0].mxu0 %v577
        %v982 = vpop.f32.mrb[0].mxu0
        %v983 = vadd.f32 0.0, %v982
        %v984 = vpop.f32.mrb[0].mxu0
        %v985 = vpop.f32.mrb[0].mxu0
        %v986 = vadd.f32 0.0, %v985
        %v987 = vpop.f32.mrb[0].mxu0
        %988 = vmatprep.mubr.bf16.mxu0 0
        %989 = vmatmul.mubr.bf16.gmra.mrb[0].mxu0 %v580
        %v990 = vpop.f32.mrb[0].mxu0
        %v991 = vadd.f32 0.0, %v990
        %v992 = vpop.f32.mrb[0].mxu0
        %v993 = vpop.f32.mrb[0].mxu0
        %v994 = vadd.f32 0.0, %v993
        %v995 = vpop.f32.mrb[0].mxu0
        %996 = vmatprep.mubr.bf16.mxu0 0
        %997 = vmatmul.mubr.bf16.gmra.mrb[0].mxu0 %v583
        %v998 = vpop.f32.mrb[0].mxu0
        %v999 = vadd.f32 0.0, %v998
        %v1000 = vpop.f32.mrb[0].mxu0
        %v1001 = vpop.f32.mrb[0].mxu0
        %v1002 = vadd.f32 0.0, %v1001
        %v1003 = vpop.f32.mrb[0].mxu0
        %1004 = vmatprep.mubr.bf16.mxu0 0
        %1005 = vmatmul.mubr.bf16.gmra.mrb[0].mxu0 %v586
        %v1006 = vpop.f32.mrb[0].mxu0
        %v1007 = vadd.f32 0.0, %v1006
        %v1008 = vpop.f32.mrb[0].mxu0
        %v1009 = vpop.f32.mrb[0].mxu0
        %v1010 = vadd.f32 0.0, %v1009
        %v1011 = vpop.f32.mrb[0].mxu0
        %1012 = vmatprep.mubr.bf16.mxu0 0
        %1013 = vmatmul.mubr.bf16.gmra.mrb[0].mxu0 %v589
        %v1014 = vpop.f32.mrb[0].mxu0
        %v1015 = vadd.f32 0.0, %v1014
        %v1016 = vpop.f32.mrb[0].mxu0
        %v1017 = vpop.f32.mrb[0].mxu0
        %v1018 = vadd.f32 0.0, %v1017
        %v1019 = vpop.f32.mrb[0].mxu0
        %1020 = vmatprep.mubr.bf16.mxu0 0
        %1021 = vmatmul.mubr.bf16.gmra.mrb[0].mxu0 %v592
        %v1022 = vpop.f32.mrb[0].mxu0
        %v1023 = vadd.f32 0.0, %v1022
        %v1024 = vpop.f32.mrb[0].mxu0
        %v1025 = vpop.f32.mrb[0].mxu0
        %v1026 = vadd.f32 0.0, %v1025
        %v1027 = vpop.f32.mrb[0].mxu0
        %1028 = vmatprep.mubr.bf16.mxu0 0
        %1029 = vmatmul.mubr.bf16.gmra.mrb[0].mxu0 %v595
        %v1030 = vpop.f32.mrb[0].mxu0
        %v1031 = vadd.f32 0.0, %v1030
        %v1032 = vpop.f32.mrb[0].mxu0
        %v1033 = vpop.f32.mrb[0].mxu0
        %v1034 = vadd.f32 0.0, %v1033
        %v1035 = vpop.f32.mrb[0].mxu0
        %1036 = vmatprep.mubr.bf16.mxu0 0
        %1037 = vmatmul.mubr.bf16.gmra.mrb[0].mxu0 %v598
        %v1038 = vpop.f32.mrb[0].mxu0
        %v1039 = vadd.f32 0.0, %v1038
        %v1040 = vpop.f32.mrb[0].mxu0
        %v1041 = vpop.f32.mrb[0].mxu0
        %v1042 = vadd.f32 0.0, %v1041
        %v1043 = vpop.f32.mrb[0].mxu0
        %1044 = vmatprep.mubr.bf16.mxu0 0
        %1045 = vmatmul.mubr.bf16.gmra.mrb[0].mxu0 %v601
        %v1046 = vpop.f32.mrb[0].mxu0
        %v1047 = vadd.f32 0.0, %v1046
        %v1048 = vpop.f32.mrb[0].mxu0
        %v1049 = vpop.f32.mrb[0].mxu0
        %v1050 = vadd.f32 0.0, %v1049
        %v1051 = vpop.f32.mrb[0].mxu0
        %1052 = vmatprep.mubr.bf16.mxu0 0
        %1053 = vmatmul.mubr.bf16.gmra.mrb[0].mxu0 %v604
        %v1054 = vpop.f32.mrb[0].mxu0
        %v1055 = vadd.f32 0.0, %v1054
        %v1056 = vpop.f32.mrb[0].mxu0
        %v1057 = vpop.f32.mrb[0].mxu0
        %v1058 = vadd.f32 0.0, %v1057
        %v1059 = vpop.f32.mrb[0].mxu0
        %1060 = vmatprep.mubr.bf16.mxu0 0
        %1061 = vmatmul.mubr.bf16.gmra.mrb[0].mxu0 %v607
        %v1062 = vpop.f32.mrb[0].mxu0
        %v1063 = vadd.f32 0.0, %v1062
        %v1064 = vpop.f32.mrb[0].mxu0
        %v1065 = vpop.f32.mrb[0].mxu0
        %v1066 = vadd.f32 0.0, %v1065
        %v1067 = vpop.f32.mrb[0].mxu0
        %1068 = vmatprep.mubr.bf16.mxu0 0
        %1069 = vmatmul.mubr.bf16.gmra.mrb[0].mxu0 %v610
        %v1070 = vpop.f32.mrb[0].mxu0
        %v1071 = vadd.f32 0.0, %v1070
        %v1072 = vpop.f32.mrb[0].mxu0
        %v1073 = vpop.f32.mrb[0].mxu0
        %v1074 = vadd.f32 0.0, %v1073
        %v1075 = vpop.f32.mrb[0].mxu0
        %1076 = vmatprep.mubr.bf16.mxu0 0
        %1077 = vmatmul.mubr.bf16.gmra.mrb[0].mxu0 %v613
        %v1078 = vpop.f32.mrb[0].mxu0
        %v1079 = vadd.f32 0.0, %v1078
        %v1080 = vpop.f32.mrb[0].mxu0
        %v1081 = vpop.f32.mrb[0].mxu0
        %v1082 = vadd.f32 0.0, %v1081
        %v1083 = vpop.f32.mrb[0].mxu0
        %1084 = vmatprep.mubr.bf16.mxu0 0
        %1085 = vmatmul.mubr.bf16.gmra.mrb[0].mxu0 %v616
        %v1086 = vpop.f32.mrb[0].mxu0
        %v1087 = vadd.f32 0.0, %v1086
        %v1088 = vpop.f32.mrb[0].mxu0
        %v1089 = vpop.f32.mrb[0].mxu0
        %v1090 = vadd.f32 0.0, %v1089
        %v1091 = vpop.f32.mrb[0].mxu0
        %1092 = vmatprep.mubr.bf16.mxu0 0
        %1093 = vmatmul.mubr.bf16.gmra.mrb[0].mxu0 %v619
        %v1094 = vpop.f32.mrb[0].mxu0
        %v1095 = vadd.f32 0.0, %v1094
        %v1096 = vpop.f32.mrb[0].mxu0
        %v1097 = vpop.f32.mrb[0].mxu0
        %v1098 = vadd.f32 0.0, %v1097
        %v1099 = vpop.f32.mrb[0].mxu0
        %1100 = vmatprep.mubr.bf16.mxu0 0
        %1101 = vmatmul.mubr.bf16.gmra.mrb[0].mxu0 %v622
        %v1102 = vpop.f32.mrb[0].mxu0
        %v1103 = vadd.f32 0.0, %v1102
        %v1104 = vpop.f32.mrb[0].mxu0
        %v1105 = vpop.f32.mrb[0].mxu0
        %v1106 = vadd.f32 0.0, %v1105
        %v1107 = vpop.f32.mrb[0].mxu0
        %1108 = vmatprep.mubr.bf16.mxu0 0
        %1109 = vmatmul.mubr.bf16.gmra.mrb[0].mxu0 %v625
        %v1110 = vpop.f32.mrb[0].mxu0
        %v1111 = vadd.f32 0.0, %v1110
        %v1112 = vpop.f32.mrb[0].mxu0
        %v1113 = vpop.f32.mrb[0].mxu0
        %v1114 = vadd.f32 0.0, %v1113
        %v1115 = vpop.f32.mrb[0].mxu0
        %1116 = vmatprep.mubr.bf16.mxu0 0
        %1117 = vmatmul.mubr.bf16.gmra.mrb[0].mxu0 %v628
        %v1118 = vpop.f32.mrb[0].mxu0
        %v1119 = vadd.f32 0.0, %v1118
        %v1120 = vpop.f32.mrb[0].mxu0
        %v1121 = vpop.f32.mrb[0].mxu0
        %v1122 = vadd.f32 0.0, %v1121
        %v1123 = vpop.f32.mrb[0].mxu0
        %1124 = vmatprep.mubr.bf16.mxu0 0
        %1125 = vmatmul.mubr.bf16.gmra.mrb[0].mxu0 %v631
        %v1126 = vpop.f32.mrb[0].mxu0
        %v1127 = vadd.f32 0.0, %v1126
        %v1128 = vpop.f32.mrb[0].mxu0
        %v1129 = vpop.f32.mrb[0].mxu0
        %v1130 = vadd.f32 0.0, %v1129
        %v1131 = vpop.f32.mrb[0].mxu0
        %1132 = vmatprep.mubr.bf16.mxu0 0
        %1133 = vmatmul.mubr.bf16.gmra.mrb[0].mxu0 %v634
        %v1134 = vpop.f32.mrb[0].mxu0
        %v1135 = vadd.f32 0.0, %v1134
        %v1136 = vpop.f32.mrb[0].mxu0
        %v1137 = vpop.f32.mrb[0].mxu0
        %v1138 = vadd.f32 0.0, %v1137
        %v1139 = vpop.f32.mrb[0].mxu0
        %1140 = vmatprep.mubr.bf16.mxu0 0
        %1141 = vmatmul.mubr.bf16.gmra.mrb[0].mxu0 %v637
        %v1142 = vpop.f32.mrb[0].mxu0
        %v1143 = vadd.f32 0.0, %v1142
        %v1144 = vpop.f32.mrb[0].mxu0
        %v1145 = vpop.f32.mrb[0].mxu0
        %v1146 = vadd.f32 0.0, %v1145
        %v1147 = vpop.f32.mrb[0].mxu0
        %1148 = vmatprep.mubr.bf16.mxu0 0
        %1149 = vmatmul.mubr.bf16.gmra.mrb[0].mxu0 %v640
        %v1150 = vpop.f32.mrb[0].mxu0
        %v1151 = vadd.f32 0.0, %v1150
        %v1152 = vpop.f32.mrb[0].mxu0
        %v1153 = vpop.f32.mrb[0].mxu0
        %v1154 = vadd.f32 0.0, %v1153
        %v1155 = vpop.f32.mrb[0].mxu0
        %1156 = vmatprep.mubr.bf16.mxu0 0
        %1157 = vmatmul.mubr.bf16.gmra.mrb[0].mxu0 %v643
        %v1158 = vpop.f32.mrb[0].mxu0
        %v1159 = vadd.f32 0.0, %v1158
        %v1160 = vpop.f32.mrb[0].mxu0
        %v1161 = vpop.f32.mrb[0].mxu0
        %v1162 = vadd.f32 0.0, %v1161
        %v1163 = vpop.f32.mrb[0].mxu0
        %1164 = vmatprep.mubr.bf16.mxu0 0
        %1165 = vmatmul.mubr.bf16.gmra.mrb[0].mxu0 %v646
        %v1166 = vpop.f32.mrb[0].mxu0
        %v1167 = vadd.f32 0.0, %v1166
        %v1168 = vpop.f32.mrb[0].mxu0
        %v1169 = vpop.f32.mrb[0].mxu0
        %v1170 = vadd.f32 0.0, %v1169
        %v1171 = vpop.f32.mrb[0].mxu0
        %1172 = vmatprep.mubr.bf16.mxu0 0
        %1173 = vmatmul.mubr.bf16.gmra.mrb[0].mxu0 %v649
        %v1174 = vpop.f32.mrb[0].mxu0
        %v1175 = vadd.f32 0.0, %v1174
        %v1176 = vpop.f32.mrb[0].mxu0
        %v1177 = vpop.f32.mrb[0].mxu0
        %v1178 = vadd.f32 0.0, %v1177
        %v1179 = vpop.f32.mrb[0].mxu0
        %1180 = vmatprep.mubr.bf16.mxu0 0
        %1181 = vmatmul.mubr.bf16.gmra.mrb[0].mxu0 %v652
        %v1182 = vpop.f32.mrb[0].mxu0
        %v1183 = vadd.f32 0.0, %v1182
        %v1184 = vpop.f32.mrb[0].mxu0
        %v1185 = vpop.f32.mrb[0].mxu0
        %v1186 = vadd.f32 0.0, %v1185
        %v1187 = vpop.f32.mrb[0].mxu0
        %1188 = vmatprep.mubr.bf16.mxu0 0
        %1189 = vmatmul.mubr.bf16.gmra.mrb[0].mxu0 %v655
        %v1190 = vpop.f32.mrb[0].mxu0
        %v1191 = vadd.f32 0.0, %v1190
        %v1192 = vpop.f32.mrb[0].mxu0
        %v1193 = vpop.f32.mrb[0].mxu0
        %v1194 = vadd.f32 0.0, %v1193
        %v1195 = vpop.f32.mrb[0].mxu0
        %1196 = vmatprep.mubr.bf16.mxu0 0
        %1197 = vmatmul.mubr.bf16.gmra.mrb[0].mxu0 %v658
        %v1198 = vpop.f32.mrb[0].mxu0
        %v1199 = vadd.f32 0.0, %v1198
        %v1200 = vpop.f32.mrb[0].mxu0
        %v1201 = vpop.f32.mrb[0].mxu0
        %v1202 = vadd.f32 0.0, %v1201
        %v1203 = vpop.f32.mrb[0].mxu0
        %1204 = vdwg.mxu0
        %v1205 = vld [vmem:[%s253] sm:$0x1]
        %v1207 = vlaneseq
        %v1208 = vshrl.u32 %v1207, 7
        %v1209 = vsub.s32 0, %v1208
        %v1210 = vrot.slane %v1205, %v1209
        %v1212 = vmul.f32 %v695, %v1210
        %v1213 = vmul.f32 %v698, %v1210
        %v1214 = vmul.f32 %v703, %v1210
        %v1215 = vmul.f32 %v706, %v1210
        %v1216 = vmul.f32 %v711, %v1210
        %v1217 = vmul.f32 %v714, %v1210
        %v1218 = vmul.f32 %v719, %v1210
        %v1219 = vmul.f32 %v722, %v1210
        %v1220 = vmul.f32 %v727, %v1210
        %v1221 = vmul.f32 %v730, %v1210
        %v1222 = vmul.f32 %v735, %v1210
        %v1223 = vmul.f32 %v738, %v1210
        %v1224 = vmul.f32 %v743, %v1210
        %v1225 = vmul.f32 %v746, %v1210
        %v1226 = vmul.f32 %v751, %v1210
        %v1227 = vmul.f32 %v754, %v1210
        %v1228 = vmul.f32 %v759, %v1210
        %v1229 = vmul.f32 %v762, %v1210
        %v1230 = vmul.f32 %v767, %v1210
        %v1231 = vmul.f32 %v770, %v1210
        %v1232 = vmul.f32 %v775, %v1210
        %v1233 = vmul.f32 %v778, %v1210
        %v1234 = vmul.f32 %v783, %v1210
        %v1235 = vmul.f32 %v786, %v1210
        %v1236 = vmul.f32 %v791, %v1210
        %v1237 = vmul.f32 %v794, %v1210
        %v1238 = vmul.f32 %v799, %v1210
        %v1239 = vmul.f32 %v802, %v1210
        %v1240 = vmul.f32 %v807, %v1210
        %v1241 = vmul.f32 %v810, %v1210
        %v1242 = vmul.f32 %v815, %v1210
        %v1243 = vmul.f32 %v818, %v1210
        %v1244 = vmul.f32 %v823, %v1210
        %v1245 = vmul.f32 %v826, %v1210
        %v1246 = vmul.f32 %v831, %v1210
        %v1247 = vmul.f32 %v834, %v1210
        %v1248 = vmul.f32 %v839, %v1210
        %v1249 = vmul.f32 %v842, %v1210
        %v1250 = vmul.f32 %v847, %v1210
        %v1251 = vmul.f32 %v850, %v1210
        %v1252 = vmul.f32 %v855, %v1210
        %v1253 = vmul.f32 %v858, %v1210
        %v1254 = vmul.f32 %v863, %v1210
        %v1255 = vmul.f32 %v866, %v1210
        %v1256 = vmul.f32 %v871, %v1210
        %v1257 = vmul.f32 %v874, %v1210
        %v1258 = vmul.f32 %v879, %v1210
        %v1259 = vmul.f32 %v882, %v1210
        %v1260 = vmul.f32 %v887, %v1210
        %v1261 = vmul.f32 %v890, %v1210
        %v1262 = vmul.f32 %v895, %v1210
        %v1263 = vmul.f32 %v898, %v1210
        %v1264 = vmul.f32 %v903, %v1210
        %v1265 = vmul.f32 %v906, %v1210
        %v1266 = vmul.f32 %v911, %v1210
        %v1267 = vmul.f32 %v914, %v1210
        %v1268 = vmul.f32 %v919, %v1210
        %v1269 = vmul.f32 %v922, %v1210
        %v1270 = vmul.f32 %v927, %v1210
        %v1271 = vmul.f32 %v930, %v1210
        %v1272 = vmul.f32 %v935, %v1210
        %v1273 = vmul.f32 %v938, %v1210
        %v1274 = vmul.f32 %v943, %v1210
        %v1275 = vmul.f32 %v946, %v1210
        %v1276 = vmul.f32 %v951, %v1210
        %v1277 = vmul.f32 %v954, %v1210
        %v1278 = vmul.f32 %v959, %v1210
        %v1279 = vmul.f32 %v962, %v1210
        %v1280 = vmul.f32 %v967, %v1210
        %v1281 = vmul.f32 %v970, %v1210
        %v1282 = vmul.f32 %v975, %v1210
        %v1283 = vmul.f32 %v978, %v1210
        %v1284 = vmul.f32 %v983, %v1210
        %v1285 = vmul.f32 %v986, %v1210
        %v1286 = vmul.f32 %v991, %v1210
        %v1287 = vmul.f32 %v994, %v1210
        %v1288 = vmul.f32 %v999, %v1210
        %v1289 = vmul.f32 %v1002, %v1210
        %v1290 = vmul.f32 %v1007, %v1210
        %v1291 = vmul.f32 %v1010, %v1210
        %v1292 = vmul.f32 %v1015, %v1210
        %v1293 = vmul.f32 %v1018, %v1210
        %v1294 = vmul.f32 %v1023, %v1210
        %v1295 = vmul.f32 %v1026, %v1210
        %v1296 = vmul.f32 %v1031, %v1210
        %v1297 = vmul.f32 %v1034, %v1210
        %v1298 = vmul.f32 %v1039, %v1210
        %v1299 = vmul.f32 %v1042, %v1210
        %v1300 = vmul.f32 %v1047, %v1210
        %v1301 = vmul.f32 %v1050, %v1210
        %v1302 = vmul.f32 %v1055, %v1210
        %v1303 = vmul.f32 %v1058, %v1210
        %v1304 = vmul.f32 %v1063, %v1210
        %v1305 = vmul.f32 %v1066, %v1210
        %v1306 = vmul.f32 %v1071, %v1210
        %v1307 = vmul.f32 %v1074, %v1210
        %v1308 = vmul.f32 %v1079, %v1210
        %v1309 = vmul.f32 %v1082, %v1210
        %v1310 = vmul.f32 %v1087, %v1210
        %v1311 = vmul.f32 %v1090, %v1210
        %v1312 = vmul.f32 %v1095, %v1210
        %v1313 = vmul.f32 %v1098, %v1210
        %v1314 = vmul.f32 %v1103, %v1210
        %v1315 = vmul.f32 %v1106, %v1210
        %v1316 = vmul.f32 %v1111, %v1210
        %v1317 = vmul.f32 %v1114, %v1210
        %v1318 = vmul.f32 %v1119, %v1210
        %v1319 = vmul.f32 %v1122, %v1210
        %v1320 = vmul.f32 %v1127, %v1210
        %v1321 = vmul.f32 %v1130, %v1210
        %v1322 = vmul.f32 %v1135, %v1210
        %v1323 = vmul.f32 %v1138, %v1210
        %v1324 = vmul.f32 %v1143, %v1210
        %v1325 = vmul.f32 %v1146, %v1210
        %v1326 = vmul.f32 %v1151, %v1210
        %v1327 = vmul.f32 %v1154, %v1210
        %v1328 = vmul.f32 %v1159, %v1210
        %v1329 = vmul.f32 %v1162, %v1210
        %v1330 = vmul.f32 %v1167, %v1210
        %v1331 = vmul.f32 %v1170, %v1210
        %v1332 = vmul.f32 %v1175, %v1210
        %v1333 = vmul.f32 %v1178, %v1210
        %v1334 = vmul.f32 %v1183, %v1210
        %v1335 = vmul.f32 %v1186, %v1210
        %v1336 = vmul.f32 %v1191, %v1210
        %v1337 = vmul.f32 %v1194, %v1210
        %v1338 = vmul.f32 %v1199, %v1210
        %v1339 = vmul.f32 %v1202, %v1210
        %v1340 = vld [vmem:[%s256] sm:$0x1]
        %v1342 = vlaneseq
        %v1343 = vshrl.u32 %v1342, 7
        %v1344 = vsub.s32 0, %v1343
        %v1345 = vrot.slane %v1340, %v1344
        %v1347 = vadd.f32 %v1212, %v1345
        %v1348 = vadd.f32 %v1213, %v1345
        %v1349 = vadd.f32 %v1214, %v1345
        %v1350 = vadd.f32 %v1215, %v1345
        %v1351 = vadd.f32 %v1216, %v1345
        %v1352 = vadd.f32 %v1217, %v1345
        %v1353 = vadd.f32 %v1218, %v1345
        %v1354 = vadd.f32 %v1219, %v1345
        %v1355 = vadd.f32 %v1220, %v1345
        %v1356 = vadd.f32 %v1221, %v1345
        %v1357 = vadd.f32 %v1222, %v1345
        %v1358 = vadd.f32 %v1223, %v1345
        %v1359 = vadd.f32 %v1224, %v1345
        %v1360 = vadd.f32 %v1225, %v1345
        %v1361 = vadd.f32 %v1226, %v1345
        %v1362 = vadd.f32 %v1227, %v1345
        %v1363 = vadd.f32 %v1228, %v1345
        %v1364 = vadd.f32 %v1229, %v1345
        %v1365 = vadd.f32 %v1230, %v1345
        %v1366 = vadd.f32 %v1231, %v1345
        %v1367 = vadd.f32 %v1232, %v1345
        %v1368 = vadd.f32 %v1233, %v1345
        %v1369 = vadd.f32 %v1234, %v1345
        %v1370 = vadd.f32 %v1235, %v1345
        %v1371 = vadd.f32 %v1236, %v1345
        %v1372 = vadd.f32 %v1237, %v1345
        %v1373 = vadd.f32 %v1238, %v1345
        %v1374 = vadd.f32 %v1239, %v1345
        %v1375 = vadd.f32 %v1240, %v1345
        %v1376 = vadd.f32 %v1241, %v1345
        %v1377 = vadd.f32 %v1242, %v1345
        %v1378 = vadd.f32 %v1243, %v1345
        %v1379 = vadd.f32 %v1244, %v1345
        %v1380 = vadd.f32 %v1245, %v1345
        %v1381 = vadd.f32 %v1246, %v1345
        %v1382 = vadd.f32 %v1247, %v1345
        %v1383 = vadd.f32 %v1248, %v1345
        %v1384 = vadd.f32 %v1249, %v1345
        %v1385 = vadd.f32 %v1250, %v1345
        %v1386 = vadd.f32 %v1251, %v1345
        %v1387 = vadd.f32 %v1252, %v1345
        %v1388 = vadd.f32 %v1253, %v1345
        %v1389 = vadd.f32 %v1254, %v1345
        %v1390 = vadd.f32 %v1255, %v1345
        %v1391 = vadd.f32 %v1256, %v1345
        %v1392 = vadd.f32 %v1257, %v1345
        %v1393 = vadd.f32 %v1258, %v1345
        %v1394 = vadd.f32 %v1259, %v1345
        %v1395 = vadd.f32 %v1260, %v1345
        %v1396 = vadd.f32 %v1261, %v1345
        %v1397 = vadd.f32 %v1262, %v1345
        %v1398 = vadd.f32 %v1263, %v1345
        %v1399 = vadd.f32 %v1264, %v1345
        %v1400 = vadd.f32 %v1265, %v1345
        %v1401 = vadd.f32 %v1266, %v1345
        %v1402 = vadd.f32 %v1267, %v1345
        %v1403 = vadd.f32 %v1268, %v1345
        %v1404 = vadd.f32 %v1269, %v1345
        %v1405 = vadd.f32 %v1270, %v1345
        %v1406 = vadd.f32 %v1271, %v1345
        %v1407 = vadd.f32 %v1272, %v1345
        %v1408 = vadd.f32 %v1273, %v1345
        %v1409 = vadd.f32 %v1274, %v1345
        %v1410 = vadd.f32 %v1275, %v1345
        %v1411 = vadd.f32 %v1276, %v1345
        %v1412 = vadd.f32 %v1277, %v1345
        %v1413 = vadd.f32 %v1278, %v1345
        %v1414 = vadd.f32 %v1279, %v1345
        %v1415 = vadd.f32 %v1280, %v1345
        %v1416 = vadd.f32 %v1281, %v1345
        %v1417 = vadd.f32 %v1282, %v1345
        %v1418 = vadd.f32 %v1283, %v1345
        %v1419 = vadd.f32 %v1284, %v1345
        %v1420 = vadd.f32 %v1285, %v1345
        %v1421 = vadd.f32 %v1286, %v1345
        %v1422 = vadd.f32 %v1287, %v1345
        %v1423 = vadd.f32 %v1288, %v1345
        %v1424 = vadd.f32 %v1289, %v1345
        %v1425 = vadd.f32 %v1290, %v1345
        %v1426 = vadd.f32 %v1291, %v1345
        %v1427 = vadd.f32 %v1292, %v1345
        %v1428 = vadd.f32 %v1293, %v1345
        %v1429 = vadd.f32 %v1294, %v1345
        %v1430 = vadd.f32 %v1295, %v1345
        %v1431 = vadd.f32 %v1296, %v1345
        %v1432 = vadd.f32 %v1297, %v1345
        %v1433 = vadd.f32 %v1298, %v1345
        %v1434 = vadd.f32 %v1299, %v1345
        %v1435 = vadd.f32 %v1300, %v1345
        %v1436 = vadd.f32 %v1301, %v1345
        %v1437 = vadd.f32 %v1302, %v1345
        %v1438 = vadd.f32 %v1303, %v1345
        %v1439 = vadd.f32 %v1304, %v1345
        %v1440 = vadd.f32 %v1305, %v1345
        %v1441 = vadd.f32 %v1306, %v1345
        %v1442 = vadd.f32 %v1307, %v1345
        %v1443 = vadd.f32 %v1308, %v1345
        %v1444 = vadd.f32 %v1309, %v1345
        %v1445 = vadd.f32 %v1310, %v1345
        %v1446 = vadd.f32 %v1311, %v1345
        %v1447 = vadd.f32 %v1312, %v1345
        %v1448 = vadd.f32 %v1313, %v1345
        %v1449 = vadd.f32 %v1314, %v1345
        %v1450 = vadd.f32 %v1315, %v1345
        %v1451 = vadd.f32 %v1316, %v1345
        %v1452 = vadd.f32 %v1317, %v1345
        %v1453 = vadd.f32 %v1318, %v1345
        %v1454 = vadd.f32 %v1319, %v1345
        %v1455 = vadd.f32 %v1320, %v1345
        %v1456 = vadd.f32 %v1321, %v1345
        %v1457 = vadd.f32 %v1322, %v1345
        %v1458 = vadd.f32 %v1323, %v1345
        %v1459 = vadd.f32 %v1324, %v1345
        %v1460 = vadd.f32 %v1325, %v1345
        %v1461 = vadd.f32 %v1326, %v1345
        %v1462 = vadd.f32 %v1327, %v1345
        %v1463 = vadd.f32 %v1328, %v1345
        %v1464 = vadd.f32 %v1329, %v1345
        %v1465 = vadd.f32 %v1330, %v1345
        %v1466 = vadd.f32 %v1331, %v1345
        %v1467 = vadd.f32 %v1332, %v1345
        %v1468 = vadd.f32 %v1333, %v1345
        %v1469 = vadd.f32 %v1334, %v1345
        %v1470 = vadd.f32 %v1335, %v1345
        %v1471 = vadd.f32 %v1336, %v1345
        %v1472 = vadd.f32 %v1337, %v1345
        %v1473 = vadd.f32 %v1338, %v1345
        %v1474 = vadd.f32 %v1339, %v1345
        %v1475 = vpack.c.bf16 %v1348, %v1347
        %v1476 = vpack.c.bf16 %v1350, %v1349
        %v1477 = vpack.c.bf16 %v1352, %v1351
        %v1478 = vpack.c.bf16 %v1354, %v1353
        %v1479 = vpack.c.bf16 %v1356, %v1355
        %v1480 = vpack.c.bf16 %v1358, %v1357
        %v1481 = vpack.c.bf16 %v1360, %v1359
        %v1482 = vpack.c.bf16 %v1362, %v1361
        %v1483 = vpack.c.bf16 %v1364, %v1363
        %v1484 = vpack.c.bf16 %v1366, %v1365
        %v1485 = vpack.c.bf16 %v1368, %v1367
        %v1486 = vpack.c.bf16 %v1370, %v1369
        %v1487 = vpack.c.bf16 %v1372, %v1371
        %v1488 = vpack.c.bf16 %v1374, %v1373
        %v1489 = vpack.c.bf16 %v1376, %v1375
        %v1490 = vpack.c.bf16 %v1378, %v1377
        %v1491 = vpack.c.bf16 %v1380, %v1379
        %v1492 = vpack.c.bf16 %v1382, %v1381
        %v1493 = vpack.c.bf16 %v1384, %v1383
        %v1494 = vpack.c.bf16 %v1386, %v1385
        %v1495 = vpack.c.bf16 %v1388, %v1387
        %v1496 = vpack.c.bf16 %v1390, %v1389
        %v1497 = vpack.c.bf16 %v1392, %v1391
        %v1498 = vpack.c.bf16 %v1394, %v1393
        %v1499 = vpack.c.bf16 %v1396, %v1395
        %v1500 = vpack.c.bf16 %v1398, %v1397
        %v1501 = vpack.c.bf16 %v1400, %v1399
        %v1502 = vpack.c.bf16 %v1402, %v1401
        %v1503 = vpack.c.bf16 %v1404, %v1403
        %v1504 = vpack.c.bf16 %v1406, %v1405
        %v1505 = vpack.c.bf16 %v1408, %v1407
        %v1506 = vpack.c.bf16 %v1410, %v1409
        %v1507 = vpack.c.bf16 %v1412, %v1411
        %v1508 = vpack.c.bf16 %v1414, %v1413
        %v1509 = vpack.c.bf16 %v1416, %v1415
        %v1510 = vpack.c.bf16 %v1418, %v1417
        %v1511 = vpack.c.bf16 %v1420, %v1419
        %v1512 = vpack.c.bf16 %v1422, %v1421
        %v1513 = vpack.c.bf16 %v1424, %v1423
        %v1514 = vpack.c.bf16 %v1426, %v1425
        %v1515 = vpack.c.bf16 %v1428, %v1427
        %v1516 = vpack.c.bf16 %v1430, %v1429
        %v1517 = vpack.c.bf16 %v1432, %v1431
        %v1518 = vpack.c.bf16 %v1434, %v1433
        %v1519 = vpack.c.bf16 %v1436, %v1435
        %v1520 = vpack.c.bf16 %v1438, %v1437
        %v1521 = vpack.c.bf16 %v1440, %v1439
        %v1522 = vpack.c.bf16 %v1442, %v1441
        %v1523 = vpack.c.bf16 %v1444, %v1443
        %v1524 = vpack.c.bf16 %v1446, %v1445
        %v1525 = vpack.c.bf16 %v1448, %v1447
        %v1526 = vpack.c.bf16 %v1450, %v1449
        %v1527 = vpack.c.bf16 %v1452, %v1451
        %v1528 = vpack.c.bf16 %v1454, %v1453
        %v1529 = vpack.c.bf16 %v1456, %v1455
        %v1530 = vpack.c.bf16 %v1458, %v1457
        %v1531 = vpack.c.bf16 %v1460, %v1459
        %v1532 = vpack.c.bf16 %v1462, %v1461
        %v1533 = vpack.c.bf16 %v1464, %v1463
        %v1534 = vpack.c.bf16 %v1466, %v1465
        %v1535 = vpack.c.bf16 %v1468, %v1467
        %v1536 = vpack.c.bf16 %v1470, %v1469
        %v1537 = vpack.c.bf16 %v1472, %v1471
        %v1538 = vpack.c.bf16 %v1474, %v1473
        %v1603 = vunpack.c.l.b16 %v1475
        %v1604 = vunpack.c.h.b16 %v1475
        %v1605 = vunpack.c.l.b16 %v1476
        %v1606 = vunpack.c.h.b16 %v1476
        %v1607 = vunpack.c.l.b16 %v1477
        %v1608 = vunpack.c.h.b16 %v1477
        %v1609 = vunpack.c.l.b16 %v1478
        %v1610 = vunpack.c.h.b16 %v1478
        %v1611 = vunpack.c.l.b16 %v1479
        %v1612 = vunpack.c.h.b16 %v1479
        %v1613 = vunpack.c.l.b16 %v1480
        %v1614 = vunpack.c.h.b16 %v1480
        %v1615 = vunpack.c.l.b16 %v1481
        %v1616 = vunpack.c.h.b16 %v1481
        %v1617 = vunpack.c.l.b16 %v1482
        %v1618 = vunpack.c.h.b16 %v1482
        %v1619 = vunpack.c.l.b16 %v1483
        %v1620 = vunpack.c.h.b16 %v1483
        %v1621 = vunpack.c.l.b16 %v1484
        %v1622 = vunpack.c.h.b16 %v1484
        %v1623 = vunpack.c.l.b16 %v1485
        %v1624 = vunpack.c.h.b16 %v1485
        %v1625 = vunpack.c.l.b16 %v1486
        %v1626 = vunpack.c.h.b16 %v1486
        %v1627 = vunpack.c.l.b16 %v1487
        %v1628 = vunpack.c.h.b16 %v1487
        %v1629 = vunpack.c.l.b16 %v1488
        %v1630 = vunpack.c.h.b16 %v1488
        %v1631 = vunpack.c.l.b16 %v1489
        %v1632 = vunpack.c.h.b16 %v1489
        %v1633 = vunpack.c.l.b16 %v1490
        %v1634 = vunpack.c.h.b16 %v1490
        %v1635 = vunpack.c.l.b16 %v1491
        %v1636 = vunpack.c.h.b16 %v1491
        %v1637 = vunpack.c.l.b16 %v1492
        %v1638 = vunpack.c.h.b16 %v1492
        %v1639 = vunpack.c.l.b16 %v1493
        %v1640 = vunpack.c.h.b16 %v1493
        %v1641 = vunpack.c.l.b16 %v1494
        %v1642 = vunpack.c.h.b16 %v1494
        %v1643 = vunpack.c.l.b16 %v1495
        %v1644 = vunpack.c.h.b16 %v1495
        %v1645 = vunpack.c.l.b16 %v1496
        %v1646 = vunpack.c.h.b16 %v1496
        %v1647 = vunpack.c.l.b16 %v1497
        %v1648 = vunpack.c.h.b16 %v1497
        %v1649 = vunpack.c.l.b16 %v1498
        %v1650 = vunpack.c.h.b16 %v1498
        %v1651 = vunpack.c.l.b16 %v1499
        %v1652 = vunpack.c.h.b16 %v1499
        %v1653 = vunpack.c.l.b16 %v1500
        %v1654 = vunpack.c.h.b16 %v1500
        %v1655 = vunpack.c.l.b16 %v1501
        %v1656 = vunpack.c.h.b16 %v1501
        %v1657 = vunpack.c.l.b16 %v1502
        %v1658 = vunpack.c.h.b16 %v1502
        %v1659 = vunpack.c.l.b16 %v1503
        %v1660 = vunpack.c.h.b16 %v1503
        %v1661 = vunpack.c.l.b16 %v1504
        %v1662 = vunpack.c.h.b16 %v1504
        %v1663 = vunpack.c.l.b16 %v1505
        %v1664 = vunpack.c.h.b16 %v1505
        %v1665 = vunpack.c.l.b16 %v1506
        %v1666 = vunpack.c.h.b16 %v1506
        %v1667 = vunpack.c.l.b16 %v1507
        %v1668 = vunpack.c.h.b16 %v1507
        %v1669 = vunpack.c.l.b16 %v1508
        %v1670 = vunpack.c.h.b16 %v1508
        %v1671 = vunpack.c.l.b16 %v1509
        %v1672 = vunpack.c.h.b16 %v1509
        %v1673 = vunpack.c.l.b16 %v1510
        %v1674 = vunpack.c.h.b16 %v1510
        %v1675 = vunpack.c.l.b16 %v1511
        %v1676 = vunpack.c.h.b16 %v1511
        %v1677 = vunpack.c.l.b16 %v1512
        %v1678 = vunpack.c.h.b16 %v1512
        %v1679 = vunpack.c.l.b16 %v1513
        %v1680 = vunpack.c.h.b16 %v1513
        %v1681 = vunpack.c.l.b16 %v1514
        %v1682 = vunpack.c.h.b16 %v1514
        %v1683 = vunpack.c.l.b16 %v1515
        %v1684 = vunpack.c.h.b16 %v1515
        %v1685 = vunpack.c.l.b16 %v1516
        %v1686 = vunpack.c.h.b16 %v1516
        %v1687 = vunpack.c.l.b16 %v1517
        %v1688 = vunpack.c.h.b16 %v1517
        %v1689 = vunpack.c.l.b16 %v1518
        %v1690 = vunpack.c.h.b16 %v1518
        %v1691 = vunpack.c.l.b16 %v1519
        %v1692 = vunpack.c.h.b16 %v1519
        %v1693 = vunpack.c.l.b16 %v1520
        %v1694 = vunpack.c.h.b16 %v1520
        %v1695 = vunpack.c.l.b16 %v1521
        %v1696 = vunpack.c.h.b16 %v1521
        %v1697 = vunpack.c.l.b16 %v1522
        %v1698 = vunpack.c.h.b16 %v1522
        %v1699 = vunpack.c.l.b16 %v1523
        %v1700 = vunpack.c.h.b16 %v1523
        %v1701 = vunpack.c.l.b16 %v1524
        %v1702 = vunpack.c.h.b16 %v1524
        %v1703 = vunpack.c.l.b16 %v1525
        %v1704 = vunpack.c.h.b16 %v1525
        %v1705 = vunpack.c.l.b16 %v1526
        %v1706 = vunpack.c.h.b16 %v1526
        %v1707 = vunpack.c.l.b16 %v1527
        %v1708 = vunpack.c.h.b16 %v1527
        %v1709 = vunpack.c.l.b16 %v1528
        %v1710 = vunpack.c.h.b16 %v1528
        %v1711 = vunpack.c.l.b16 %v1529
        %v1712 = vunpack.c.h.b16 %v1529
        %v1713 = vunpack.c.l.b16 %v1530
        %v1714 = vunpack.c.h.b16 %v1530
        %v1715 = vunpack.c.l.b16 %v1531
        %v1716 = vunpack.c.h.b16 %v1531
        %v1717 = vunpack.c.l.b16 %v1532
        %v1718 = vunpack.c.h.b16 %v1532
        %v1719 = vunpack.c.l.b16 %v1533
        %v1720 = vunpack.c.h.b16 %v1533
        %v1721 = vunpack.c.l.b16 %v1534
        %v1722 = vunpack.c.h.b16 %v1534
        %v1723 = vunpack.c.l.b16 %v1535
        %v1724 = vunpack.c.h.b16 %v1535
        %v1725 = vunpack.c.l.b16 %v1536
        %v1726 = vunpack.c.h.b16 %v1536
        %v1727 = vunpack.c.l.b16 %v1537
        %v1728 = vunpack.c.h.b16 %v1537
        %v1729 = vunpack.c.l.b16 %v1538
        %v1730 = vunpack.c.h.b16 %v1538
        %v1731 = vpack.c.b16 %v1603, %v1603
        %v1732 = vpack.c.b16 %v1604, %v1604
        %v1733 = vpack.c.b16 %v1605, %v1605
        %v1734 = vpack.c.b16 %v1606, %v1606
        %v1735 = vpack.c.b16 %v1607, %v1607
        %v1736 = vpack.c.b16 %v1608, %v1608
        %v1737 = vpack.c.b16 %v1609, %v1609
        %v1738 = vpack.c.b16 %v1610, %v1610
        %v1739 = vpack.c.b16 %v1611, %v1611
        %v1740 = vpack.c.b16 %v1612, %v1612
        %v1741 = vpack.c.b16 %v1613, %v1613
        %v1742 = vpack.c.b16 %v1614, %v1614
        %v1743 = vpack.c.b16 %v1615, %v1615
        %v1744 = vpack.c.b16 %v1616, %v1616
        %v1745 = vpack.c.b16 %v1617, %v1617
        %v1746 = vpack.c.b16 %v1618, %v1618
        %v1747 = vpack.c.b16 %v1619, %v1619
        %v1748 = vpack.c.b16 %v1620, %v1620
        %v1749 = vpack.c.b16 %v1621, %v1621
        %v1750 = vpack.c.b16 %v1622, %v1622
        %v1751 = vpack.c.b16 %v1623, %v1623
        %v1752 = vpack.c.b16 %v1624, %v1624
        %v1753 = vpack.c.b16 %v1625, %v1625
        %v1754 = vpack.c.b16 %v1626, %v1626
        %v1755 = vpack.c.b16 %v1627, %v1627
        %v1756 = vpack.c.b16 %v1628, %v1628
        %v1757 = vpack.c.b16 %v1629, %v1629
        %v1758 = vpack.c.b16 %v1630, %v1630
        %v1759 = vpack.c.b16 %v1631, %v1631
        %v1760 = vpack.c.b16 %v1632, %v1632
        %v1761 = vpack.c.b16 %v1633, %v1633
        %v1762 = vpack.c.b16 %v1634, %v1634
        %v1763 = vpack.c.b16 %v1635, %v1635
        %v1764 = vpack.c.b16 %v1636, %v1636
        %v1765 = vpack.c.b16 %v1637, %v1637
        %v1766 = vpack.c.b16 %v1638, %v1638
        %v1767 = vpack.c.b16 %v1639, %v1639
        %v1768 = vpack.c.b16 %v1640, %v1640
        %v1769 = vpack.c.b16 %v1641, %v1641
        %v1770 = vpack.c.b16 %v1642, %v1642
        %v1771 = vpack.c.b16 %v1643, %v1643
        %v1772 = vpack.c.b16 %v1644, %v1644
        %v1773 = vpack.c.b16 %v1645, %v1645
        %v1774 = vpack.c.b16 %v1646, %v1646
        %v1775 = vpack.c.b16 %v1647, %v1647
        %v1776 = vpack.c.b16 %v1648, %v1648
        %v1777 = vpack.c.b16 %v1649, %v1649
        %v1778 = vpack.c.b16 %v1650, %v1650
        %v1779 = vpack.c.b16 %v1651, %v1651
        %v1780 = vpack.c.b16 %v1652, %v1652
        %v1781 = vpack.c.b16 %v1653, %v1653
        %v1782 = vpack.c.b16 %v1654, %v1654
        %v1783 = vpack.c.b16 %v1655, %v1655
        %v1784 = vpack.c.b16 %v1656, %v1656
        %v1785 = vpack.c.b16 %v1657, %v1657
        %v1786 = vpack.c.b16 %v1658, %v1658
        %v1787 = vpack.c.b16 %v1659, %v1659
        %v1788 = vpack.c.b16 %v1660, %v1660
        %v1789 = vpack.c.b16 %v1661, %v1661
        %v1790 = vpack.c.b16 %v1662, %v1662
        %v1791 = vpack.c.b16 %v1663, %v1663
        %v1792 = vpack.c.b16 %v1664, %v1664
        %v1793 = vpack.c.b16 %v1665, %v1665
        %v1794 = vpack.c.b16 %v1666, %v1666
        %v1795 = vpack.c.b16 %v1667, %v1667
        %v1796 = vpack.c.b16 %v1668, %v1668
        %v1797 = vpack.c.b16 %v1669, %v1669
        %v1798 = vpack.c.b16 %v1670, %v1670
        %v1799 = vpack.c.b16 %v1671, %v1671
        %v1800 = vpack.c.b16 %v1672, %v1672
        %v1801 = vpack.c.b16 %v1673, %v1673
        %v1802 = vpack.c.b16 %v1674, %v1674
        %v1803 = vpack.c.b16 %v1675, %v1675
        %v1804 = vpack.c.b16 %v1676, %v1676
        %v1805 = vpack.c.b16 %v1677, %v1677
        %v1806 = vpack.c.b16 %v1678, %v1678
        %v1807 = vpack.c.b16 %v1679, %v1679
        %v1808 = vpack.c.b16 %v1680, %v1680
        %v1809 = vpack.c.b16 %v1681, %v1681
        %v1810 = vpack.c.b16 %v1682, %v1682
        %v1811 = vpack.c.b16 %v1683, %v1683
        %v1812 = vpack.c.b16 %v1684, %v1684
        %v1813 = vpack.c.b16 %v1685, %v1685
        %v1814 = vpack.c.b16 %v1686, %v1686
        %v1815 = vpack.c.b16 %v1687, %v1687
        %v1816 = vpack.c.b16 %v1688, %v1688
        %v1817 = vpack.c.b16 %v1689, %v1689
        %v1818 = vpack.c.b16 %v1690, %v1690
        %v1819 = vpack.c.b16 %v1691, %v1691
        %v1820 = vpack.c.b16 %v1692, %v1692
        %v1821 = vpack.c.b16 %v1693, %v1693
        %v1822 = vpack.c.b16 %v1694, %v1694
        %v1823 = vpack.c.b16 %v1695, %v1695
        %v1824 = vpack.c.b16 %v1696, %v1696
        %v1825 = vpack.c.b16 %v1697, %v1697
        %v1826 = vpack.c.b16 %v1698, %v1698
        %v1827 = vpack.c.b16 %v1699, %v1699
        %v1828 = vpack.c.b16 %v1700, %v1700
        %v1829 = vpack.c.b16 %v1701, %v1701
        %v1830 = vpack.c.b16 %v1702, %v1702
        %v1831 = vpack.c.b16 %v1703, %v1703
        %v1832 = vpack.c.b16 %v1704, %v1704
        %v1833 = vpack.c.b16 %v1705, %v1705
        %v1834 = vpack.c.b16 %v1706, %v1706
        %v1835 = vpack.c.b16 %v1707, %v1707
        %v1836 = vpack.c.b16 %v1708, %v1708
        %v1837 = vpack.c.b16 %v1709, %v1709
        %v1838 = vpack.c.b16 %v1710, %v1710
        %v1839 = vpack.c.b16 %v1711, %v1711
        %v1840 = vpack.c.b16 %v1712, %v1712
        %v1841 = vpack.c.b16 %v1713, %v1713
        %v1842 = vpack.c.b16 %v1714, %v1714
        %v1843 = vpack.c.b16 %v1715, %v1715
        %v1844 = vpack.c.b16 %v1716, %v1716
        %v1845 = vpack.c.b16 %v1717, %v1717
        %v1846 = vpack.c.b16 %v1718, %v1718
        %v1847 = vpack.c.b16 %v1719, %v1719
        %v1848 = vpack.c.b16 %v1720, %v1720
        %v1849 = vpack.c.b16 %v1721, %v1721
        %v1850 = vpack.c.b16 %v1722, %v1722
        %v1851 = vpack.c.b16 %v1723, %v1723
        %v1852 = vpack.c.b16 %v1724, %v1724
        %v1853 = vpack.c.b16 %v1725, %v1725
        %v1854 = vpack.c.b16 %v1726, %v1726
        %v1855 = vpack.c.b16 %v1727, %v1727
        %v1856 = vpack.c.b16 %v1728, %v1728
        %v1857 = vpack.c.b16 %v1729, %v1729
        %v1858 = vpack.c.b16 %v1730, %v1730
        %1987 = vst [vmem:[%s240] sm:$0xf] %v1731
        %1988 = vst [vmem:[%s240 + $0x4] sm:$0xf] %v1732
        %1989 = vst [vmem:[%s240 + $0x8] sm:$0xf] %v1733
        %1990 = vst [vmem:[%s240 + $0xc] sm:$0xf] %v1734
        %1991 = vst [vmem:[%s240 + $0x10] sm:$0xf] %v1735
        %1992 = vst [vmem:[%s240 + $0x14] sm:$0xf] %v1736
        %1993 = vst [vmem:[%s240 + $0x18] sm:$0xf] %v1737
        %1994 = vst [vmem:[%s240 + $0x1c] sm:$0xf] %v1738
        %1995 = vst [vmem:[%s240 + $0x20] sm:$0xf] %v1739
        %1996 = vst [vmem:[%s240 + $0x24] sm:$0xf] %v1740
        %1997 = vst [vmem:[%s240 + $0x28] sm:$0xf] %v1741
        %1998 = vst [vmem:[%s240 + $0x2c] sm:$0xf] %v1742
        %1999 = vst [vmem:[%s240 + $0x30] sm:$0xf] %v1743
        %2000 = vst [vmem:[%s240 + $0x34] sm:$0xf] %v1744
        %2001 = vst [vmem:[%s240 + $0x38] sm:$0xf] %v1745
        %2002 = vst [vmem:[%s240 + $0x3c] sm:$0xf] %v1746
        %2003 = vst [vmem:[%s240 + $0x40] sm:$0xf] %v1747
        %2004 = vst [vmem:[%s240 + $0x44] sm:$0xf] %v1748
        %2005 = vst [vmem:[%s240 + $0x48] sm:$0xf] %v1749
        %2006 = vst [vmem:[%s240 + $0x4c] sm:$0xf] %v1750
        %2007 = vst [vmem:[%s240 + $0x50] sm:$0xf] %v1751
        %2008 = vst [vmem:[%s240 + $0x54] sm:$0xf] %v1752
        %2009 = vst [vmem:[%s240 + $0x58] sm:$0xf] %v1753
        %2010 = vst [vmem:[%s240 + $0x5c] sm:$0xf] %v1754
        %2011 = vst [vmem:[%s240 + $0x60] sm:$0xf] %v1755
        %2012 = vst [vmem:[%s240 + $0x64] sm:$0xf] %v1756
        %2013 = vst [vmem:[%s240 + $0x68] sm:$0xf] %v1757
        %2014 = vst [vmem:[%s240 + $0x6c] sm:$0xf] %v1758
        %2015 = vst [vmem:[%s240 + $0x70] sm:$0xf] %v1759
        %2016 = vst [vmem:[%s240 + $0x74] sm:$0xf] %v1760
        %2017 = vst [vmem:[%s240 + $0x78] sm:$0xf] %v1761
        %2018 = vst [vmem:[%s240 + $0x7c] sm:$0xf] %v1762
        %2019 = vst [vmem:[%s240 + $0x80] sm:$0xf] %v1763
        %2020 = vst [vmem:[%s240 + $0x84] sm:$0xf] %v1764
        %2021 = vst [vmem:[%s240 + $0x88] sm:$0xf] %v1765
        %2022 = vst [vmem:[%s240 + $0x8c] sm:$0xf] %v1766
        %2023 = vst [vmem:[%s240 + $0x90] sm:$0xf] %v1767
        %2024 = vst [vmem:[%s240 + $0x94] sm:$0xf] %v1768
        %2025 = vst [vmem:[%s240 + $0x98] sm:$0xf] %v1769
        %2026 = vst [vmem:[%s240 + $0x9c] sm:$0xf] %v1770
        %2027 = vst [vmem:[%s240 + $0xa0] sm:$0xf] %v1771
        %2028 = vst [vmem:[%s240 + $0xa4] sm:$0xf] %v1772
        %2029 = vst [vmem:[%s240 + $0xa8] sm:$0xf] %v1773
        %2030 = vst [vmem:[%s240 + $0xac] sm:$0xf] %v1774
        %2031 = vst [vmem:[%s240 + $0xb0] sm:$0xf] %v1775
        %2032 = vst [vmem:[%s240 + $0xb4] sm:$0xf] %v1776
        %2033 = vst [vmem:[%s240 + $0xb8] sm:$0xf] %v1777
        %2034 = vst [vmem:[%s240 + $0xbc] sm:$0xf] %v1778
        %2035 = vst [vmem:[%s240 + $0xc0] sm:$0xf] %v1779
        %2036 = vst [vmem:[%s240 + $0xc4] sm:$0xf] %v1780
        %2037 = vst [vmem:[%s240 + $0xc8] sm:$0xf] %v1781
        %2038 = vst [vmem:[%s240 + $0xcc] sm:$0xf] %v1782
        %2039 = vst [vmem:[%s240 + $0xd0] sm:$0xf] %v1783
        %2040 = vst [vmem:[%s240 + $0xd4] sm:$0xf] %v1784
        %2041 = vst [vmem:[%s240 + $0xd8] sm:$0xf] %v1785
        %2042 = vst [vmem:[%s240 + $0xdc] sm:$0xf] %v1786
        %2043 = vst [vmem:[%s240 + $0xe0] sm:$0xf] %v1787
        %2044 = vst [vmem:[%s240 + $0xe4] sm:$0xf] %v1788
        %2045 = vst [vmem:[%s240 + $0xe8] sm:$0xf] %v1789
        %2046 = vst [vmem:[%s240 + $0xec] sm:$0xf] %v1790
        %2047 = vst [vmem:[%s240 + $0xf0] sm:$0xf] %v1791
        %2048 = vst [vmem:[%s240 + $0xf4] sm:$0xf] %v1792
        %2049 = vst [vmem:[%s240 + $0xf8] sm:$0xf] %v1793
        %2050 = vst [vmem:[%s240 + $0xfc] sm:$0xf] %v1794
        %2051 = vst [vmem:[%s240 + $0x100] sm:$0xf] %v1795
        %2052 = vst [vmem:[%s240 + $0x104] sm:$0xf] %v1796
        %2053 = vst [vmem:[%s240 + $0x108] sm:$0xf] %v1797
        %2054 = vst [vmem:[%s240 + $0x10c] sm:$0xf] %v1798
        %2055 = vst [vmem:[%s240 + $0x110] sm:$0xf] %v1799
        %2056 = vst [vmem:[%s240 + $0x114] sm:$0xf] %v1800
        %2057 = vst [vmem:[%s240 + $0x118] sm:$0xf] %v1801
        %2058 = vst [vmem:[%s240 + $0x11c] sm:$0xf] %v1802
        %2059 = vst [vmem:[%s240 + $0x120] sm:$0xf] %v1803
        %2060 = vst [vmem:[%s240 + $0x124] sm:$0xf] %v1804
        %2061 = vst [vmem:[%s240 + $0x128] sm:$0xf] %v1805
        %2062 = vst [vmem:[%s240 + $0x12c] sm:$0xf] %v1806
        %2063 = vst [vmem:[%s240 + $0x130] sm:$0xf] %v1807
        %2064 = vst [vmem:[%s240 + $0x134] sm:$0xf] %v1808
        %2065 = vst [vmem:[%s240 + $0x138] sm:$0xf] %v1809
        %2066 = vst [vmem:[%s240 + $0x13c] sm:$0xf] %v1810
        %2067 = vst [vmem:[%s240 + $0x140] sm:$0xf] %v1811
        %2068 = vst [vmem:[%s240 + $0x144] sm:$0xf] %v1812
        %2069 = vst [vmem:[%s240 + $0x148] sm:$0xf] %v1813
        %2070 = vst [vmem:[%s240 + $0x14c] sm:$0xf] %v1814
        %2071 = vst [vmem:[%s240 + $0x150] sm:$0xf] %v1815
        %2072 = vst [vmem:[%s240 + $0x154] sm:$0xf] %v1816
        %2073 = vst [vmem:[%s240 + $0x158] sm:$0xf] %v1817
        %2074 = vst [vmem:[%s240 + $0x15c] sm:$0xf] %v1818
        %2075 = vst [vmem:[%s240 + $0x160] sm:$0xf] %v1819
        %2076 = vst [vmem:[%s240 + $0x164] sm:$0xf] %v1820
        %2077 = vst [vmem:[%s240 + $0x168] sm:$0xf] %v1821
        %2078 = vst [vmem:[%s240 + $0x16c] sm:$0xf] %v1822
        %2079 = vst [vmem:[%s240 + $0x170] sm:$0xf] %v1823
        %2080 = vst [vmem:[%s240 + $0x174] sm:$0xf] %v1824
        %2081 = vst [vmem:[%s240 + $0x178] sm:$0xf] %v1825
        %2082 = vst [vmem:[%s240 + $0x17c] sm:$0xf] %v1826
        %2083 = vst [vmem:[%s240 + $0x180] sm:$0xf] %v1827
        %2084 = vst [vmem:[%s240 + $0x184] sm:$0xf] %v1828
        %2085 = vst [vmem:[%s240 + $0x188] sm:$0xf] %v1829
        %2086 = vst [vmem:[%s240 + $0x18c] sm:$0xf] %v1830
        %2087 = vst [vmem:[%s240 + $0x190] sm:$0xf] %v1831
        %2088 = vst [vmem:[%s240 + $0x194] sm:$0xf] %v1832
        %2089 = vst [vmem:[%s240 + $0x198] sm:$0xf] %v1833
        %2090 = vst [vmem:[%s240 + $0x19c] sm:$0xf] %v1834
        %2091 = vst [vmem:[%s240 + $0x1a0] sm:$0xf] %v1835
        %2092 = vst [vmem:[%s240 + $0x1a4] sm:$0xf] %v1836
        %2093 = vst [vmem:[%s240 + $0x1a8] sm:$0xf] %v1837
        %2094 = vst [vmem:[%s240 + $0x1ac] sm:$0xf] %v1838
        %2095 = vst [vmem:[%s240 + $0x1b0] sm:$0xf] %v1839
        %2096 = vst [vmem:[%s240 + $0x1b4] sm:$0xf] %v1840
        %2097 = vst [vmem:[%s240 + $0x1b8] sm:$0xf] %v1841
        %2098 = vst [vmem:[%s240 + $0x1bc] sm:$0xf] %v1842
        %2099 = vst [vmem:[%s240 + $0x1c0] sm:$0xf] %v1843
        %2100 = vst [vmem:[%s240 + $0x1c4] sm:$0xf] %v1844
        %2101 = vst [vmem:[%s240 + $0x1c8] sm:$0xf] %v1845
        %2102 = vst [vmem:[%s240 + $0x1cc] sm:$0xf] %v1846
        %2103 = vst [vmem:[%s240 + $0x1d0] sm:$0xf] %v1847
        %2104 = vst [vmem:[%s240 + $0x1d4] sm:$0xf] %v1848
        %2105 = vst [vmem:[%s240 + $0x1d8] sm:$0xf] %v1849
        %2106 = vst [vmem:[%s240 + $0x1dc] sm:$0xf] %v1850
        %2107 = vst [vmem:[%s240 + $0x1e0] sm:$0xf] %v1851
        %2108 = vst [vmem:[%s240 + $0x1e4] sm:$0xf] %v1852
        %2109 = vst [vmem:[%s240 + $0x1e8] sm:$0xf] %v1853
        %2110 = vst [vmem:[%s240 + $0x1ec] sm:$0xf] %v1854
        %2111 = vst [vmem:[%s240 + $0x1f0] sm:$0xf] %v1855
        %2112 = vst [vmem:[%s240 + $0x1f4] sm:$0xf] %v1856
        %2113 = vst [vmem:[%s240 + $0x1f8] sm:$0xf] %v1857
        %2114 = vst [vmem:[%s240 + $0x1fc] sm:$0xf] %v1858
        %s2115 = sand.u32 %s144, 1
        %s2116 = scalar_lea.sflag [#allocation3], %s2115
        %s2117 = sand.u32 %s144, 1
        %s2118 = smul.addr %s2117, 512
        %s2119 = scalar_lea.vmem [#allocation2], %s2118
        // Predicated region
        $region37: #{tpu_custom_call.1} parent=35 // pred_check
          %p2120 = pneg %p154
        $region38: #{tpu_custom_call.1} parent=35 // pred_check_branch
          %2122 = sbr.rel (%p2120) target = $region40
        $region39: #{tpu_custom_call.1} parent=35 // pred_region
          %s2123 = smul.u32 128, %s22
          %s2125 = ssub.s32 8192, 8192
          %2126 = vsyncadd %s2116, %s2125
          %s2127 = sadd.s32 %s23, %s2123
          %s2128 = smul.addr %s2127, 64
          %s2129 = scalar_lea.hbm %s4, %s2128
          %s2130 = sshll.u32 %s2119, 4
          %s2131 = int_to_ptr.vmem [resolvable:$true] %s2130
          %2136 = dma.vmem_to_hbm [thread:$0]  %s2131, 8192, %s2129, %s2116, 64, 64, 4
        $region40: #{tpu_custom_call.1} parent=35 // pred_fallthru
          _
      $region36: #{tpu_custom_call.1} parent=5 // pred_fallthru
        _
      %p2137 = scmp.le.s32.totalorder 2, %s13
      // Predicated region
      $region41: #{tpu_custom_call.1} parent=5 // pred_check
        %p2138 = pneg %p2137
      $region42: #{tpu_custom_call.1} parent=5 // pred_check_branch
        %2140 = sbr.rel (%p2138) target = $region44
      $region43: #{tpu_custom_call.1} parent=5 // pred_region
        %s2141 = ssub.s32 %s13, 2
        // Predicated region
        $region45: #{tpu_custom_call.1} parent=43 // pred_check
          %p2142 = pneg %p160
        $region46: #{tpu_custom_call.1} parent=43 // pred_check_branch
          %2144 = sbr.rel (%p2142) target = $region48
        $region47: #{tpu_custom_call.1} parent=43 // pred_region
          %s2145 = sand.u32 %s145, 1
          %s2146 = scalar_lea.sflag [#allocation3], %s2145
          %s2147 = sand.u32 %s145, 1
          %s2148 = smul.addr %s2147, 512
          %s2149 = scalar_lea.vmem [#allocation2], %s2148
          %2150 = dma.done %s2146, 8192
        $region48: #{tpu_custom_call.1} parent=43 // pred_fallthru
          _
      $region44: #{tpu_custom_call.1} parent=5 // pred_fallthru
        _
    $region6: #{tpu_custom_call.1} parent=1 // loop_footer
      %s17 = sadd.s32 1, %s13
    $region7: #{tpu_custom_call.1} parent=1 // loop_footer_branch
      %12 = sbr.rel target = $region3
    $region8: #{tpu_custom_call.1} parent=1 // loop_exit
      _
    %2151 = vsyncpa [#allocation3], 1
    %s2152 = scalar_lea.sflag [#allocation3], 1
    %2153 = vsyncpa %s2152, 1

</llo_original>
